<compile_context>
chip_gen: v7x
topology: tpu7x:2x2x1
jax: 0.10.0
libtpu: 0.0.40
codegen_flags: <defaults>
</compile_context>

<pallas_src>
import numpy as np
import jax
import jax.numpy as jnp
from jax import lax
from jax.experimental import pallas as pl
from jax.experimental.pallas import tpu as pltpu

H = 64        # hidden size of the synthetic seq2seq model
V = 128       # decoder vocab size (config_dec.vocab_size)
MAX_POS = 32  # position_embeddings.num_embeddings


def _full_spec(shape):
    nd = len(shape)
    return pl.BlockSpec(shape, lambda *_: (0,) * nd)


# --------------------------- prepare (encode) kernel -------------------------
# Fuses: encoder projection tanh(x@W_enc+b), masked mean-pool -> ctx (per row,
# beam-replicated + padded), ctx@W2+b1 (step-invariant decoder bias), and the
# step-invariant tables word_emb@W1 and pos_emb@W1.
def _prepare_kernel(x_ref, pool_ref, wenc_ref, benc_ref, w2_ref, b1_ref,
                    wemb_ref, pemb_ref, w1_ref,
                    ctxp_ref, embw1_ref, posw1_ref):
    enc = jnp.tanh(
        jnp.dot(x_ref[...], wenc_ref[...], preferred_element_type=jnp.float32)
        + benc_ref[...])
    ctx = jnp.dot(pool_ref[...], enc, preferred_element_type=jnp.float32)
    ctxp_ref[...] = (jnp.dot(ctx, w2_ref[...],
                             preferred_element_type=jnp.float32) + b1_ref[...])
    embw1_ref[...] = jnp.dot(wemb_ref[...], w1_ref[...],
                             preferred_element_type=jnp.float32)
    posw1_ref[...] = jnp.dot(pemb_ref[...], w1_ref[...],
                             preferred_element_type=jnp.float32)


def make_prepare_call(batch, src_len, n_rows):
    bs = batch * src_len
    in_shapes = [(bs, H), (n_rows, bs), (H, H), (1, H), (H, H), (1, H),
                 (V, H), (MAX_POS, H), (H, H)]
    return pl.pallas_call(
        _prepare_kernel,
        grid=(1,),
        in_specs=[_full_spec(s) for s in in_shapes],
        out_specs=[_full_spec((n_rows, H)), _full_spec((V, H)),
                   _full_spec((MAX_POS, H))],
        out_shape=(jax.ShapeDtypeStruct((n_rows, H), jnp.float32),
                   jax.ShapeDtypeStruct((V, H), jnp.float32),
                   jax.ShapeDtypeStruct((MAX_POS, H), jnp.float32)),
    )


# ----------------------- beam-search decode-loop kernel ----------------------
# Single invocation.  The decode step recurrence runs in an in-kernel
# lax.fori_loop; per-step (parent beam, appended word) back-pointers are
# accumulated into resident lane-dense output blocks.
def make_decode_kernel(batch, beam, n_rows, n_steps, t_lanes, eos, pad_idx,
                       len_penalty_ratio):
    n_real = batch * beam
    NEG = -1e30
    BIG = 2 ** 30

    def kernel(ctxp_ref, embw1_ref, posw1_ref, wout_ref, bout_ref,
               init_tok_ref, maxlen_ref,
               parent_ref, word_ref, seqlen_ref,
               score_s, size_s, eos_s, last_s):
        # ------- step-invariant constants: built ONCE per kernel call -------
        row_col = lax.broadcasted_iota(jnp.int32, (n_rows, 1), 0)
        lane_v = lax.broadcasted_iota(jnp.int32, (n_rows, V), 1)
        lane_t = lax.broadcasted_iota(jnp.int32, (n_rows, t_lanes), 1)
        lane_n = lax.broadcasted_iota(jnp.int32, (n_rows, n_rows), 1)
        sub_n = lax.broadcasted_iota(jnp.int32, (n_rows, n_rows), 0)
        eye = lane_n == sub_n
        valid_col = row_col < n_real
        base_col = jnp.zeros((n_rows, 1), jnp.int32)
        k_col = jnp.zeros((n_rows, 1), jnp.int32)
        for b in range(batch):
            for k in range(beam):
                m = row_col == (b * beam + k)
                base_col = jnp.where(m, b * beam, base_col)
                k_col = jnp.where(m, k, k_col)
        flat_idx = k_col * V + lane_v            # candidate id within (beam*V)
        grp_masks = [base_col == (b * beam) for b in range(batch)]
        dest_masks = [jnp.logical_and(k_col == k, valid_col)
                      for k in range(beam)]
        first_k = k_col == 0
        neg_col = jnp.full((n_rows, 1), NEG, jnp.float32)
        big_col = jnp.full((n_rows, 1), BIG, jnp.int32)

        # small step-invariant operands, loaded once
        ctxp = ctxp_ref[...]
        bout = bout_ref[...]
        maxlen = maxlen_ref[...]

        # ----------------------- init recurrence state ----------------------
        init_tok = init_tok_ref[...]
        last_s[...] = init_tok
        eos_s[...] = jnp.where(valid_col,
                               (init_tok == eos).astype(jnp.float32), 0.0)
        score_s[...] = jnp.zeros_like(score_s)
        size_s[...] = jnp.zeros_like(size_s)
        parent_ref[...] = jnp.zeros_like(parent_ref)
        word_ref[...] = jnp.zeros_like(word_ref)
        seqlen_ref[...] = jnp.full((1, 1), 1, jnp.int32)

        # ----------------------------- step body -----------------------------
        def step(t, carry):
            old_score = score_s[...]
            old_size = size_s[...]
            old_eos = eos_s[...]
            old_last = last_s[...]

            # reference break ("all beams emitted eos") -> freeze the state.
            # TODO(synk): gate the whole body with pl.when on an SMEM flag
            # instead of the vectorised freeze (needs vector->scalar control).
            ecnt = jnp.sum(old_eos, axis=0, keepdims=True)       # (1,1)
            done = ecnt >= (n_real - 0.5)
            gt1 = t >= 1
            if beam > 1:
                done = jnp.logical_and(done, gt1)   # ref cannot break at i==1

            # TODO(synk): the real seq2seq_model.attend_output (transformer
            # cross-attention over the full target prefix) is not available; a
            # synthetic last-token + pooled-context decoder step stands in.
            onehot_tok = (old_last == lane_v).astype(jnp.float32)       # (N,V)
            tok_h = jnp.dot(onehot_tok, embw1_ref[...],
                            preferred_element_type=jnp.float32)         # (N,H)
            pos_h = posw1_ref[pl.ds(t, 1), :]                           # (1,H)
            hid = jnp.tanh(tok_h + pos_h + ctxp)
            # (use precision=HIGHEST here for bit-level parity if needed)
            logits = (jnp.dot(hid, wout_ref[...],
                              preferred_element_type=jnp.float32) + bout)
            zmax = jnp.max(logits, axis=-1, keepdims=True)
            zz = logits - zmax
            logp = zz - jnp.log(jnp.sum(jnp.exp(zz), axis=-1, keepdims=True))

            # finished-beam / length-limit masking (mirrors reference exactly)
            has_eos = old_eos > 0.5
            reach = maxlen < (t + 2)                 # max_lens < i + 1
            logp = jnp.where(has_eos, 0.0, logp)
            logp = jnp.where(jnp.logical_and(gt1, reach), 0.0, logp)

            # length-penalised cumulative scores (reciprocal on (N,1), then mul)
            if beam > 1:
                pen = jnp.exp(len_penalty_ratio
                              * jnp.log((old_size + 6.0) / 6.0))
                inv_pen = pl.reciprocal(pen, approx=False)
                bscore = (old_score + logp) * inv_pen
            else:
                bscore = old_score + logp

            # step 1 uses a single (unreplicated) hypothesis per batch element
            allow = jnp.logical_and(valid_col, jnp.logical_or(gt1, first_k))
            work = jnp.where(allow, bscore, NEG)

            # per-batch top-k over beam*V candidates (min-flat-index tie-break)
            # lane reductions shared across batch groups; tiny (N,1) group
            # resolutions per batch.
            new_score = jnp.zeros((n_rows, 1), jnp.float32)
            new_idx = jnp.zeros((n_rows, 1), jnp.int32)
            for k in range(beam):
                lane_max = jnp.max(work, axis=1, keepdims=True)      # (N,1)
                gmax = neg_col
                for b in range(batch):
                    v = jnp.max(jnp.where(grp_masks[b], lane_max, NEG),
                                axis=0, keepdims=True)               # (1,1)
                    gmax = jnp.where(grp_masks[b], v, gmax)
                hit = work == gmax
                lane_idx = jnp.min(jnp.where(hit, flat_idx, BIG),
                                   axis=1, keepdims=True)            # (N,1)
                gidx = big_col
                for b in range(batch):
                    v = jnp.min(jnp.where(grp_masks[b], lane_idx, BIG),
                                axis=0, keepdims=True)
                    gidx = jnp.where(grp_masks[b], v, gidx)
                new_score = jnp.where(dest_masks[k], gmax, new_score)
                new_idx = jnp.where(dest_masks[k], gidx, new_idx)
                if k + 1 < beam:
                    work = jnp.where(flat_idx == gidx, NEG, work)

            # reference index overrides for finished / length-limited beams
            idx = new_idx
            idx = jnp.where(jnp.logical_and(gt1, reach), pad_idx, idx)
            idx = jnp.where(jnp.logical_and(gt1, has_eos), pad_idx, idx)
            parent = jnp.zeros_like(idx)
            for j in range(1, beam):          # parent = idx // V (no int div)
                parent = parent + (idx >= j * V).astype(jnp.int32)
            word = idx - parent * V           # word = idx % V

            # gather parent-beam running state via one-hot selection
            src = base_col + parent
            size_row = jnp.sum(jnp.where(eye, old_size, 0.0),
                               axis=0, keepdims=True)
            eos_row = jnp.sum(jnp.where(eye, old_eos, 0.0),
                              axis=0, keepdims=True)
            sel = lane_n == src
            g_size = jnp.sum(jnp.where(sel, size_row, 0.0),
                             axis=1, keepdims=True)
            g_eos = jnp.sum(jnp.where(sel, eos_row, 0.0),
                            axis=1, keepdims=True)

            n_size = g_size + (word != pad_idx).astype(jnp.float32)
            n_eos = jnp.maximum(g_eos, (word == eos).astype(jnp.float32))
            n_eos = jnp.where(valid_col, n_eos, 0.0)   # padded rows never end

            # freeze the recurrence once the reference loop would have broken
            score_s[...] = jnp.where(done, old_score, new_score)
            size_s[...] = jnp.where(done, old_size, n_size)
            eos_s[...] = jnp.where(done, old_eos, n_eos)
            last_s[...] = jnp.where(done, old_last, word)

            # record back-pointers (parent beam, appended word) for this step
            live = jnp.logical_not(done)
            step_hot = jnp.logical_and(lane_t == t, live)
            parent_ref[...] = jnp.where(step_hot, parent, parent_ref[...])
            word_ref[...] = jnp.where(step_hot, word, word_ref[...])
            seqlen_ref[...] = jnp.where(done, seqlen_ref[...],
                                        jnp.zeros((1, 1), jnp.int32) + (t + 2))
            return carry

        lax.fori_loop(0, n_steps, step, 0)

    return kernel


def make_loop_call(batch, beam, n_rows, n_steps, t_lanes, eos, pad_idx,
                   len_penalty_ratio):
    kernel = make_decode_kernel(batch, beam, n_rows, n_steps, t_lanes, eos,
                                pad_idx, len_penalty_ratio)
    in_shapes = [(n_rows, H), (V, H), (MAX_POS, H), (H, V), (1, V),
                 (n_rows, 1), (n_rows, 1)]
    return pl.pallas_call(
        kernel,
        grid=(1,),
        in_specs=[_full_spec(s) for s in in_shapes],     # constant index maps
        out_specs=[_full_spec((n_rows, t_lanes)),        # resident accumulators
                   _full_spec((n_rows, t_lanes)),
                   _full_spec((1, 1))],
        out_shape=(jax.ShapeDtypeStruct((n_rows, t_lanes), jnp.int32),
                   jax.ShapeDtypeStruct((n_rows, t_lanes), jnp.int32),
                   jax.ShapeDtypeStruct((1, 1), jnp.int32)),
        scratch_shapes=[pltpu.VMEM((n_rows, 1), jnp.float32),   # scores
                        pltpu.VMEM((n_rows, 1), jnp.float32),   # sizes
                        pltpu.VMEM((n_rows, 1), jnp.float32),   # eos flags
                        pltpu.VMEM((n_rows, 1), jnp.int32)],    # last token
        compiler_params=pltpu.CompilerParams(
            dimension_semantics=("arbitrary",)),
    )


# ------------------------- parameters (deterministic) ------------------------
def init_params(key):
    ks = jax.random.split(key, 6)
    s = 0.1
    return {
        "word_emb": jax.random.normal(ks[0], (V, H), jnp.float32) * s,
        "pos_emb":  jax.random.normal(ks[1], (MAX_POS, H), jnp.float32) * s,
        "w_enc":    jax.random.normal(ks[2], (H, H), jnp.float32) * s,
        "b_enc":    jnp.zeros((1, H), jnp.float32),
        "w1":       jax.random.normal(ks[3], (H, H), jnp.float32) * s,
        "w2":       jax.random.normal(ks[4], (H, H), jnp.float32) * s,
        "b1":       jnp.zeros((1, H), jnp.float32),
        "w_out":    jax.random.normal(ks[5], (H, V), jnp.float32) * s,
        "b_out":    jnp.zeros((1, V), jnp.float32),
    }


# ------------------------ get_outputs_until_eos (np) -------------------------
def get_outputs_until_eos_np(eos, outputs, size_limit=None,
                             remove_first_token=False):
    if outputs.ndim == 1:
        outputs = outputs[None, :]
    rows, cols = np.nonzero(outputs == eos)
    actual_outputs = {}
    for r, c in zip(rows, cols):
        r, c = int(r), int(c)
        if r not in actual_outputs:
            actual_outputs[r] = outputs[r, (1 if remove_first_token else 0):c]
    final_outputs = []
    for r in range(outputs.shape[0]):
        if r not in actual_outputs:
            last_index = (outputs.shape[1] if size_limit is None
                          else int(size_limit[r]))
            actual_outputs[r] = outputs[r,
                                        (1 if remove_first_token else 0):last_index]
        final_outputs.append(actual_outputs[r])
    return final_outputs


# ------------------------------ runner / decode -------------------------------
def build_runner(batch, beam, src_len, max_len, eos, pad_idx,
                 len_penalty_ratio):
    n_real = batch * beam
    n_rows = ((max(n_real, 8) + 7) // 8) * 8          # pad rows to sublane mult
    n_steps = max_len - 1
    t_lanes = ((n_steps + 127) // 128) * 128          # lane-dense outputs
    prep = make_prepare_call(batch, src_len, n_rows)
    loop = make_loop_call(batch, beam, n_rows, n_steps, t_lanes, eos, pad_idx,
                          len_penalty_ratio)

    @jax.jit
    def run(params, src_inputs, pool_rows, init_tok, maxlen_rows):
        src_emb = jnp.take(params["word_emb"], src_inputs, axis=0)   # (B,S,H)
        x = src_emb.reshape(batch * src_len, H)
        ctx_proj, emb_w1, pos_w1 = prep(
            x, pool_rows, params["w_enc"], params["b_enc"], params["w2"],
            params["b1"], params["word_emb"], params["pos_emb"], params["w1"])
        parent, word, seqlen = loop(ctx_proj, emb_w1, pos_w1, params["w_out"],
                                    params["b_out"], init_tok, maxlen_rows)
        return parent, word, seqlen, ctx_proj, emb_w1

    return run, n_rows, n_steps


def beam_decode(run_fn, params, src_inputs, first_tokens, src_mask, *,
                batch, beam, pad_idx, eos, max_lens, n_rows,
                unpad_output=True):
    n_real = batch * beam
    S = src_inputs.shape[1]

    # one-time host-side setup (the decode loop itself is fully on device)
    pool = (src_mask / np.maximum(src_mask.sum(axis=1, keepdims=True), 1.0)
            ).astype(np.float32)
    pool_rows = np.zeros((n_rows, batch * S), np.float32)
    for r in range(n_real):
        b = r // beam
        pool_rows[r, b * S:(b + 1) * S] = pool[b]
    init_tok = np.full((n_rows, 1), pad_idx, np.int32)
    init_tok[:n_real, 0] = np.repeat(np.asarray(first_tokens, np.int32), beam)
    maxlen_rows = np.full((n_rows, 1), MAX_POS + 16, np.int32)
    maxlen_rows[:n_real, 0] = np.repeat(np.asarray(max_lens, np.int32), beam)

    parent, word, seqlen, ctx_proj, emb_w1 = run_fn(
        params, jnp.asarray(src_inputs, jnp.int32), jnp.asarray(pool_rows),
        jnp.asarray(init_tok), jnp.asarray(maxlen_rows))
    jax.block_until_ready((parent, word, seqlen))
    parent = np.asarray(parent)
    word = np.asarray(word)
    seq_len = int(np.asarray(seqlen)[0, 0])

    # back-track the best (beam 0) hypothesis of each batch element
    outputs = np.zeros((batch, seq_len), dtype=np.int64)
    for b in range(batch):
        outputs[b, 0] = int(first_tokens[b])
        kbeam = 0
        for pos in range(seq_len - 1, 0, -1):
            r = b * beam + kbeam
            outputs[b, pos] = int(word[r, pos - 1])
            kbeam = int(parent[r, pos - 1])

    if unpad_output:
        finals = get_outputs_until_eos_np(eos, outputs, size_limit=max_lens)
    else:
        finals = [outputs[r] for r in range(batch)]
    aux = {"ctx_proj": np.asarray(ctx_proj), "emb_w1": np.asarray(emb_w1),
           "seq_len": seq_len}
    return finals, aux


# ----------------------------------- main -------------------------------------
if __name__ == "__main__":
    key = jax.random.PRNGKey(0)
    pkey, dkey = jax.random.split(key)
    params = init_params(pkey)

    batch, src_len = 2, 8
    beam_width = 3
    pad_idx, eos, bos = 0, 2, 1
    max_len_a, max_len_b, len_penalty_ratio = 1.1, 5, 0.8

    src_inputs = np.array(jax.random.randint(dkey, (batch, src_len), 3, V),
                          dtype=np.int64)
    src_sizes = np.array([src_len, src_len - 2], dtype=np.int64)
    src_mask = (np.arange(src_len)[None, :] < src_sizes[:, None]).astype(np.float32)
    src_inputs = src_inputs * src_mask.astype(np.int64)   # pad positions -> pad
    first_tokens = np.array([bos, bos], dtype=np.int64)

    max_len_func = lambda s: min(int(max_len_a * s + max_len_b), MAX_POS)
    max_len = max_len_func(src_len)
    max_lens = np.array([max_len_func(int(s)) for s in src_sizes], dtype=np.int64)

    run_fn, n_rows, n_steps = build_runner(batch, beam_width, src_len, max_len,
                                           eos, pad_idx, len_penalty_ratio)

    outs, aux = beam_decode(run_fn, params, src_inputs, first_tokens, src_mask,
                            batch=batch, beam=beam_width, pad_idx=pad_idx,
                            eos=eos, max_lens=max_lens, n_rows=n_rows)

    # --- numerical validation of the Pallas prepare kernel vs NumPy ---
    we = np.asarray(params["word_emb"])
    w1 = np.asarray(params["w1"])
    assert np.allclose(aux["emb_w1"], we @ w1, atol=2e-4, rtol=2e-4)
    enc = np.tanh(we[src_inputs] @ np.asarray(params["w_enc"])
                  + np.asarray(params["b_enc"]))
    ctx = ((enc * src_mask[..., None]).sum(axis=1)
           / np.maximum(src_mask.sum(axis=1, keepdims=True), 1.0))
    ctxp = ctx @ np.asarray(params["w2"]) + np.asarray(params["b1"])
    assert np.allclose(aux["ctx_proj"][:batch * beam_width],
                       np.repeat(ctxp, beam_width, axis=0),
                       atol=2e-4, rtol=2e-4)

    # --- structural checks on the on-device beam-search bookkeeping ---
    assert 2 <= aux["seq_len"] <= n_steps + 1
    assert len(outs) == batch
    for b, o in enumerate(outs):
        o = np.asarray(o)
        assert o.ndim == 1 and 1 <= o.shape[0] <= int(max_lens[b])
        assert int(o[0]) == bos
        assert np.all((o >= 0) & (o < V))
        assert eos not in o.tolist()

    print("KERNEL_OK")
</pallas_src>

<mosaic_0001>
module attributes {stable_mosaic.version = 11 : i64} {
  func.func @_prepare_kernel(%arg0: i32, %arg1: memref<16x64xf32, #tpu.memory_space<vmem>>, %arg2: memref<8x16xf32, #tpu.memory_space<vmem>>, %arg3: memref<64x64xf32, #tpu.memory_space<vmem>>, %arg4: memref<1x64xf32, #tpu.memory_space<vmem>>, %arg5: memref<64x64xf32, #tpu.memory_space<vmem>>, %arg6: memref<1x64xf32, #tpu.memory_space<vmem>>, %arg7: memref<128x64xf32, #tpu.memory_space<vmem>>, %arg8: memref<32x64xf32, #tpu.memory_space<vmem>>, %arg9: memref<64x64xf32, #tpu.memory_space<vmem>>, %arg10: memref<8x64xf32, #tpu.memory_space<vmem>>, %arg11: memref<128x64xf32, #tpu.memory_space<vmem>>, %arg12: memref<32x64xf32, #tpu.memory_space<vmem>>) attributes {dimension_semantics = [#tpu.dimension_semantics<arbitrary>], iteration_bounds = array<i64: 1>, scalar_prefetch = 0 : i64, scratch_operands = 0 : i64, tpu.core_type = #tpu.core_type<tc>, window_params = [{pipeline_mode = #tpu.pipeline_mode<synchronous>, transform_indices = @transform_0, window_bounds = array<i64: 16, 64>}, {pipeline_mode = #tpu.pipeline_mode<synchronous>, transform_indices = @transform_1, window_bounds = array<i64: 8, 16>}, {pipeline_mode = #tpu.pipeline_mode<synchronous>, transform_indices = @transform_2, window_bounds = array<i64: 64, 64>}, {pipeline_mode = #tpu.pipeline_mode<synchronous>, transform_indices = @transform_3, window_bounds = array<i64: 1, 64>}, {pipeline_mode = #tpu.pipeline_mode<synchronous>, transform_indices = @transform_4, window_bounds = array<i64: 64, 64>}, {pipeline_mode = #tpu.pipeline_mode<synchronous>, transform_indices = @transform_5, window_bounds = array<i64: 1, 64>}, {pipeline_mode = #tpu.pipeline_mode<synchronous>, transform_indices = @transform_6, window_bounds = array<i64: 128, 64>}, {pipeline_mode = #tpu.pipeline_mode<synchronous>, transform_indices = @transform_7, window_bounds = array<i64: 32, 64>}, {pipeline_mode = #tpu.pipeline_mode<synchronous>, transform_indices = @transform_8, window_bounds = array<i64: 64, 64>}, {pipeline_mode = #tpu.pipeline_mode<synchronous>, transform_indices = @transform_9, window_bounds = array<i64: 8, 64>}, {pipeline_mode = #tpu.pipeline_mode<synchronous>, transform_indices = @transform_10, window_bounds = array<i64: 128, 64>}, {pipeline_mode = #tpu.pipeline_mode<synchronous>, transform_indices = @transform_11, window_bounds = array<i64: 32, 64>}]} {
    %c0 = arith.constant 0 : index
    %c0_0 = arith.constant 0 : index
    %0 = vector.load %arg1[%c0, %c0_0] : memref<16x64xf32, #tpu.memory_space<vmem>>, vector<16x64xf32>
    %c0_1 = arith.constant 0 : index
    %c0_2 = arith.constant 0 : index
    %1 = vector.load %arg3[%c0_1, %c0_2] : memref<64x64xf32, #tpu.memory_space<vmem>>, vector<64x64xf32>
    %cst = arith.constant dense<0.000000e+00> : vector<16x64xf32>
    %2 = tpu.matmul %0, %1, %cst {dimension_numbers = #tpu.dot_dimension_numbers<[1], [0], [0], [1], [0, 0, 1, 1], [], []>} : vector<16x64xf32>, vector<64x64xf32>, vector<16x64xf32> -> vector<16x64xf32>
    %c0_3 = arith.constant 0 : index
    %c0_4 = arith.constant 0 : index
    %3 = vector.load %arg4[%c0_3, %c0_4] : memref<1x64xf32, #tpu.memory_space<vmem>>, vector<1x64xf32>
    %4 = vector.broadcast %3 : vector<1x64xf32> to vector<16x64xf32>
    %5 = arith.addf %2, %4 : vector<16x64xf32>
    %6 = math.tanh %5 : vector<16x64xf32>
    %c0_5 = arith.constant 0 : index
    %c0_6 = arith.constant 0 : index
    %7 = vector.load %arg2[%c0_5, %c0_6] : memref<8x16xf32, #tpu.memory_space<vmem>>, vector<8x16xf32>
    %cst_7 = arith.constant dense<0.000000e+00> : vector<8x64xf32>
    %8 = tpu.matmul %7, %6, %cst_7 {dimension_numbers = #tpu.dot_dimension_numbers<[1], [0], [0], [1], [0, 0, 1, 1], [], []>} : vector<8x16xf32>, vector<16x64xf32>, vector<8x64xf32> -> vector<8x64xf32>
    %c0_8 = arith.constant 0 : index
    %c0_9 = arith.constant 0 : index
    %9 = vector.load %arg5[%c0_8, %c0_9] : memref<64x64xf32, #tpu.memory_space<vmem>>, vector<64x64xf32>
    %cst_10 = arith.constant dense<0.000000e+00> : vector<8x64xf32>
    %10 = tpu.matmul %8, %9, %cst_10 {dimension_numbers = #tpu.dot_dimension_numbers<[1], [0], [0], [1], [0, 0, 1, 1], [], []>} : vector<8x64xf32>, vector<64x64xf32>, vector<8x64xf32> -> vector<8x64xf32>
    %c0_11 = arith.constant 0 : index
    %c0_12 = arith.constant 0 : index
    %11 = vector.load %arg6[%c0_11, %c0_12] : memref<1x64xf32, #tpu.memory_space<vmem>>, vector<1x64xf32>
    %12 = vector.broadcast %11 : vector<1x64xf32> to vector<8x64xf32>
    %13 = arith.addf %10, %12 : vector<8x64xf32>
    %c0_13 = arith.constant 0 : index
    %c0_14 = arith.constant 0 : index
    %14 = vector.load %arg10[%c0_13, %c0_14] : memref<8x64xf32, #tpu.memory_space<vmem>>, vector<8x64xf32>
    tpu.vector_store %arg10[%c0_13, %c0_14], %13 {strides = array<i32>} : memref<8x64xf32, #tpu.memory_space<vmem>>, vector<8x64xf32>,
    %c0_15 = arith.constant 0 : index
    %c0_16 = arith.constant 0 : index
    %15 = vector.load %arg7[%c0_15, %c0_16] : memref<128x64xf32, #tpu.memory_space<vmem>>, vector<128x64xf32>
    %c0_17 = arith.constant 0 : index
    %c0_18 = arith.constant 0 : index
    %16 = vector.load %arg9[%c0_17, %c0_18] : memref<64x64xf32, #tpu.memory_space<vmem>>, vector<64x64xf32>
    %cst_19 = arith.constant dense<0.000000e+00> : vector<128x64xf32>
    %17 = tpu.matmul %15, %16, %cst_19 {dimension_numbers = #tpu.dot_dimension_numbers<[1], [0], [0], [1], [0, 0, 1, 1], [], []>} : vector<128x64xf32>, vector<64x64xf32>, vector<128x64xf32> -> vector<128x64xf32>
    %c0_20 = arith.constant 0 : index
    %c0_21 = arith.constant 0 : index
    %18 = vector.load %arg11[%c0_20, %c0_21] : memref<128x64xf32, #tpu.memory_space<vmem>>, vector<128x64xf32>
    tpu.vector_store %arg11[%c0_20, %c0_21], %17 {strides = array<i32>} : memref<128x64xf32, #tpu.memory_space<vmem>>, vector<128x64xf32>,
    %c0_22 = arith.constant 0 : index
    %c0_23 = arith.constant 0 : index
    %19 = vector.load %arg8[%c0_22, %c0_23] : memref<32x64xf32, #tpu.memory_space<vmem>>, vector<32x64xf32>
    %c0_24 = arith.constant 0 : index
    %c0_25 = arith.constant 0 : index
    %20 = vector.load %arg9[%c0_24, %c0_25] : memref<64x64xf32, #tpu.memory_space<vmem>>, vector<64x64xf32>
    %cst_26 = arith.constant dense<0.000000e+00> : vector<32x64xf32>
    %21 = tpu.matmul %19, %20, %cst_26 {dimension_numbers = #tpu.dot_dimension_numbers<[1], [0], [0], [1], [0, 0, 1, 1], [], []>} : vector<32x64xf32>, vector<64x64xf32>, vector<32x64xf32> -> vector<32x64xf32>
    %c0_27 = arith.constant 0 : index
    %c0_28 = arith.constant 0 : index
    %22 = vector.load %arg12[%c0_27, %c0_28] : memref<32x64xf32, #tpu.memory_space<vmem>>, vector<32x64xf32>
    tpu.vector_store %arg12[%c0_27, %c0_28], %21 {strides = array<i32>} : memref<32x64xf32, #tpu.memory_space<vmem>>, vector<32x64xf32>,
    return
  }
  func.func @transform_0(%arg0: i32) -> (i32, i32) {
    %c0_i32 = arith.constant 0 : i32
    %c0_i32_0 = arith.constant 0 : i32
    %c0_i32_1 = arith.constant 0 : i32
    return %c0_i32, %c0_i32_0 : i32, i32
  }
  func.func @transform_1(%arg0: i32) -> (i32, i32) {
    %c0_i32 = arith.constant 0 : i32
    %c0_i32_0 = arith.constant 0 : i32
    %c0_i32_1 = arith.constant 0 : i32
    return %c0_i32, %c0_i32_0 : i32, i32
  }
  func.func @transform_2(%arg0: i32) -> (i32, i32) {
    %c0_i32 = arith.constant 0 : i32
    %c0_i32_0 = arith.constant 0 : i32
    %c0_i32_1 = arith.constant 0 : i32
    return %c0_i32, %c0_i32_0 : i32, i32
  }
  func.func @transform_3(%arg0: i32) -> (i32, i32) {
    %c0_i32 = arith.constant 0 : i32
    %c0_i32_0 = arith.constant 0 : i32
    %c0_i32_1 = arith.constant 0 : i32
    return %c0_i32, %c0_i32_0 : i32, i32
  }
  func.func @transform_4(%arg0: i32) -> (i32, i32) {
    %c0_i32 = arith.constant 0 : i32
    %c0_i32_0 = arith.constant 0 : i32
    %c0_i32_1 = arith.constant 0 : i32
    return %c0_i32, %c0_i32_0 : i32, i32
  }
  func.func @transform_5(%arg0: i32) -> (i32, i32) {
    %c0_i32 = arith.constant 0 : i32
    %c0_i32_0 = arith.constant 0 : i32
    %c0_i32_1 = arith.constant 0 : i32
    return %c0_i32, %c0_i32_0 : i32, i32
  }
  func.func @transform_6(%arg0: i32) -> (i32, i32) {
    %c0_i32 = arith.constant 0 : i32
    %c0_i32_0 = arith.constant 0 : i32
    %c0_i32_1 = arith.constant 0 : i32
    return %c0_i32, %c0_i32_0 : i32, i32
  }
  func.func @transform_7(%arg0: i32) -> (i32, i32) {
    %c0_i32 = arith.constant 0 : i32
    %c0_i32_0 = arith.constant 0 : i32
    %c0_i32_1 = arith.constant 0 : i32
    return %c0_i32, %c0_i32_0 : i32, i32
  }
  func.func @transform_8(%arg0: i32) -> (i32, i32) {
    %c0_i32 = arith.constant 0 : i32
    %c0_i32_0 = arith.constant 0 : i32
    %c0_i32_1 = arith.constant 0 : i32
    return %c0_i32, %c0_i32_0 : i32, i32
  }
  func.func @transform_9(%arg0: i32) -> (i32, i32) {
    %c0_i32 = arith.constant 0 : i32
    %c0_i32_0 = arith.constant 0 : i32
    %c0_i32_1 = arith.constant 0 : i32
    return %c0_i32, %c0_i32_0 : i32, i32
  }
  func.func @transform_10(%arg0: i32) -> (i32, i32) {
    %c0_i32 = arith.constant 0 : i32
    %c0_i32_0 = arith.constant 0 : i32
    %c0_i32_1 = arith.constant 0 : i32
    return %c0_i32, %c0_i32_0 : i32, i32
  }
  func.func @transform_11(%arg0: i32) -> (i32, i32) {
    %c0_i32 = arith.constant 0 : i32
    %c0_i32_0 = arith.constant 0 : i32
    %c0_i32_1 = arith.constant 0 : i32
    return %c0_i32, %c0_i32_0 : i32, i32
  }
}

module attributes {stable_mosaic.version = 11 : i64} {
  func.func @kernel(%arg0: i32, %arg1: memref<8x64xf32, #tpu.memory_space<vmem>>, %arg2: memref<128x64xf32, #tpu.memory_space<vmem>>, %arg3: memref<32x64xf32, #tpu.memory_space<vmem>>, %arg4: memref<64x128xf32, #tpu.memory_space<vmem>>, %arg5: memref<1x128xf32, #tpu.memory_space<vmem>>, %arg6: memref<8x1xi32, #tpu.memory_space<vmem>>, %arg7: memref<8x1xi32, #tpu.memory_space<vmem>>, %arg8: memref<8x128xi32, #tpu.memory_space<vmem>>, %arg9: memref<8x128xi32, #tpu.memory_space<vmem>>, %arg10: memref<1x1xi32, #tpu.memory_space<vmem>>, %arg11: memref<8x1xf32, #tpu.memory_space<vmem>>, %arg12: memref<8x1xf32, #tpu.memory_space<vmem>>, %arg13: memref<8x1xf32, #tpu.memory_space<vmem>>, %arg14: memref<8x1xi32, #tpu.memory_space<vmem>>) attributes {dimension_semantics = [#tpu.dimension_semantics<arbitrary>], iteration_bounds = array<i64: 1>, scalar_prefetch = 0 : i64, scratch_operands = 4 : i64, tpu.core_type = #tpu.core_type<tc>, window_params = [{pipeline_mode = #tpu.pipeline_mode<synchronous>, transform_indices = @transform_0, window_bounds = array<i64: 8, 64>}, {pipeline_mode = #tpu.pipeline_mode<synchronous>, transform_indices = @transform_1, window_bounds = array<i64: 128, 64>}, {pipeline_mode = #tpu.pipeline_mode<synchronous>, transform_indices = @transform_2, window_bounds = array<i64: 32, 64>}, {pipeline_mode = #tpu.pipeline_mode<synchronous>, transform_indices = @transform_3, window_bounds = array<i64: 64, 128>}, {pipeline_mode = #tpu.pipeline_mode<synchronous>, transform_indices = @transform_4, window_bounds = array<i64: 1, 128>}, {pipeline_mode = #tpu.pipeline_mode<synchronous>, transform_indices = @transform_5, window_bounds = array<i64: 8, 1>}, {pipeline_mode = #tpu.pipeline_mode<synchronous>, transform_indices = @transform_6, window_bounds = array<i64: 8, 1>}, {pipeline_mode = #tpu.pipeline_mode<synchronous>, transform_indices = @transform_7, window_bounds = array<i64: 8, 128>}, {pipeline_mode = #tpu.pipeline_mode<synchronous>, transform_indices = @transform_8, window_bounds = array<i64: 8, 128>}, {pipeline_mode = #tpu.pipeline_mode<synchronous>, transform_indices = @transform_9, window_bounds = array<i64: 1, 1>}]} {
    %0 = tpu.iota {dimensions = array<i32: 0>} : vector<8x1xi32>
    %1 = tpu.iota {dimensions = array<i32: 1>} : vector<8x128xi32>
    %2 = tpu.iota {dimensions = array<i32: 1>} : vector<8x128xi32>
    %3 = tpu.iota {dimensions = array<i32: 1>} : vector<8x8xi32>
    %4 = tpu.iota {dimensions = array<i32: 0>} : vector<8x8xi32>
    %5 = arith.cmpi eq, %3, %4 : vector<8x8xi32>
    %c6_i32 = arith.constant 6 : i32
    %6 = vector.broadcast %c6_i32 : i32 to vector<8x1xi32>
    %7 = arith.cmpi slt, %0, %6 : vector<8x1xi32>
    %c0_i32 = arith.constant 0 : i32
    %8 = vector.broadcast %c0_i32 : i32 to vector<8x1xi32>
    %c0_i32_0 = arith.constant 0 : i32
    %9 = vector.broadcast %c0_i32_0 : i32 to vector<8x1xi32>
    %c0_i32_1 = arith.constant 0 : i32
    %10 = vector.broadcast %c0_i32_1 : i32 to vector<8x1xi32>
    %11 = arith.cmpi eq, %0, %10 : vector<8x1xi32>
    %c0_i32_2 = arith.constant 0 : i32
    %12 = vector.broadcast %c0_i32_2 : i32 to vector<8x1xi32>
    %13 = arith.select %11, %12, %8 : vector<8x1xi1>, vector<8x1xi32>
    %c0_i32_3 = arith.constant 0 : i32
    %14 = vector.broadcast %c0_i32_3 : i32 to vector<8x1xi32>
    %15 = arith.select %11, %14, %9 : vector<8x1xi1>, vector<8x1xi32>
    %c1_i32 = arith.constant 1 : i32
    %16 = vector.broadcast %c1_i32 : i32 to vector<8x1xi32>
    %17 = arith.cmpi eq, %0, %16 : vector<8x1xi32>
    %c0_i32_4 = arith.constant 0 : i32
    %18 = vector.broadcast %c0_i32_4 : i32 to vector<8x1xi32>
    %19 = arith.select %17, %18, %13 : vector<8x1xi1>, vector<8x1xi32>
    %c1_i32_5 = arith.constant 1 : i32
    %20 = vector.broadcast %c1_i32_5 : i32 to vector<8x1xi32>
    %21 = arith.select %17, %20, %15 : vector<8x1xi1>, vector<8x1xi32>
    %c2_i32 = arith.constant 2 : i32
    %22 = vector.broadcast %c2_i32 : i32 to vector<8x1xi32>
    %23 = arith.cmpi eq, %0, %22 : vector<8x1xi32>
    %c0_i32_6 = arith.constant 0 : i32
    %24 = vector.broadcast %c0_i32_6 : i32 to vector<8x1xi32>
    %25 = arith.select %23, %24, %19 : vector<8x1xi1>, vector<8x1xi32>
    %c2_i32_7 = arith.constant 2 : i32
    %26 = vector.broadcast %c2_i32_7 : i32 to vector<8x1xi32>
    %27 = arith.select %23, %26, %21 : vector<8x1xi1>, vector<8x1xi32>
    %c3_i32 = arith.constant 3 : i32
    %28 = vector.broadcast %c3_i32 : i32 to vector<8x1xi32>
    %29 = arith.cmpi eq, %0, %28 : vector<8x1xi32>
    %c3_i32_8 = arith.constant 3 : i32
    %30 = vector.broadcast %c3_i32_8 : i32 to vector<8x1xi32>
    %31 = arith.select %29, %30, %25 : vector<8x1xi1>, vector<8x1xi32>
    %c0_i32_9 = arith.constant 0 : i32
    %32 = vector.broadcast %c0_i32_9 : i32 to vector<8x1xi32>
    %33 = arith.select %29, %32, %27 : vector<8x1xi1>, vector<8x1xi32>
    %c4_i32 = arith.constant 4 : i32
    %34 = vector.broadcast %c4_i32 : i32 to vector<8x1xi32>
    %35 = arith.cmpi eq, %0, %34 : vector<8x1xi32>
    %c3_i32_10 = arith.constant 3 : i32
    %36 = vector.broadcast %c3_i32_10 : i32 to vector<8x1xi32>
    %37 = arith.select %35, %36, %31 : vector<8x1xi1>, vector<8x1xi32>
    %c1_i32_11 = arith.constant 1 : i32
    %38 = vector.broadcast %c1_i32_11 : i32 to vector<8x1xi32>
    %39 = arith.select %35, %38, %33 : vector<8x1xi1>, vector<8x1xi32>
    %c5_i32 = arith.constant 5 : i32
    %40 = vector.broadcast %c5_i32 : i32 to vector<8x1xi32>
    %41 = arith.cmpi eq, %0, %40 : vector<8x1xi32>
    %c3_i32_12 = arith.constant 3 : i32
    %42 = vector.broadcast %c3_i32_12 : i32 to vector<8x1xi32>
    %43 = arith.select %41, %42, %37 : vector<8x1xi1>, vector<8x1xi32>
    %c2_i32_13 = arith.constant 2 : i32
    %44 = vector.broadcast %c2_i32_13 : i32 to vector<8x1xi32>
    %45 = arith.select %41, %44, %39 : vector<8x1xi1>, vector<8x1xi32>
    %c128_i32 = arith.constant 128 : i32
    %46 = vector.broadcast %c128_i32 : i32 to vector<8x1xi32>
    %47 = arith.muli %45, %46 : vector<8x1xi32>
    %48 = vector.broadcast %47 : vector<8x1xi32> to vector<8x128xi32>
    %49 = arith.addi %48, %1 : vector<8x128xi32>
    %c0_i32_14 = arith.constant 0 : i32
    %50 = vector.broadcast %c0_i32_14 : i32 to vector<8x1xi32>
    %51 = arith.cmpi eq, %43, %50 : vector<8x1xi32>
    %c3_i32_15 = arith.constant 3 : i32
    %52 = vector.broadcast %c3_i32_15 : i32 to vector<8x1xi32>
    %53 = arith.cmpi eq, %43, %52 : vector<8x1xi32>
    %c0_i32_16 = arith.constant 0 : i32
    %54 = vector.broadcast %c0_i32_16 : i32 to vector<8x1xi32>
    %55 = arith.cmpi eq, %45, %54 : vector<8x1xi32>
    %56 = arith.andi %55, %7 : vector<8x1xi1>
    %c1_i32_17 = arith.constant 1 : i32
    %57 = vector.broadcast %c1_i32_17 : i32 to vector<8x1xi32>
    %58 = arith.cmpi eq, %45, %57 : vector<8x1xi32>
    %59 = arith.andi %58, %7 : vector<8x1xi1>
    %c2_i32_18 = arith.constant 2 : i32
    %60 = vector.broadcast %c2_i32_18 : i32 to vector<8x1xi32>
    %61 = arith.cmpi eq, %45, %60 : vector<8x1xi32>
    %62 = arith.andi %61, %7 : vector<8x1xi1>
    %c0_i32_19 = arith.constant 0 : i32
    %63 = vector.broadcast %c0_i32_19 : i32 to vector<8x1xi32>
    %64 = arith.cmpi eq, %45, %63 : vector<8x1xi32>
    %cst = arith.constant -1.000000e+30 : f32
    %65 = vector.broadcast %cst : f32 to vector<8x1xf32>
    %c1073741824_i32 = arith.constant 1073741824 : i32
    %66 = vector.broadcast %c1073741824_i32 : i32 to vector<8x1xi32>
    %c0 = arith.constant 0 : index
    %c0_20 = arith.constant 0 : index
    %67 = vector.load %arg1[%c0, %c0_20] : memref<8x64xf32, #tpu.memory_space<vmem>>, vector<8x64xf32>
    %c0_21 = arith.constant 0 : index
    %c0_22 = arith.constant 0 : index
    %68 = vector.load %arg5[%c0_21, %c0_22] : memref<1x128xf32, #tpu.memory_space<vmem>>, vector<1x128xf32>
    %c0_23 = arith.constant 0 : index
    %c0_24 = arith.constant 0 : index
    %69 = vector.load %arg7[%c0_23, %c0_24] : memref<8x1xi32, #tpu.memory_space<vmem>>, vector<8x1xi32>
    %c0_25 = arith.constant 0 : index
    %c0_26 = arith.constant 0 : index
    %70 = vector.load %arg6[%c0_25, %c0_26] : memref<8x1xi32, #tpu.memory_space<vmem>>, vector<8x1xi32>
    %c0_27 = arith.constant 0 : index
    %c0_28 = arith.constant 0 : index
    %71 = vector.load %arg14[%c0_27, %c0_28] : memref<8x1xi32, #tpu.memory_space<vmem>>, vector<8x1xi32>
    tpu.vector_store %arg14[%c0_27, %c0_28], %70 {strides = array<i32>} : memref<8x1xi32, #tpu.memory_space<vmem>>, vector<8x1xi32>,
    %c2_i32_29 = arith.constant 2 : i32
    %72 = vector.broadcast %c2_i32_29 : i32 to vector<8x1xi32>
    %73 = arith.cmpi eq, %70, %72 : vector<8x1xi32>
    %74 = arith.extui %73 : vector<8x1xi1> to vector<8x1xi32>
    %75 = arith.sitofp %74 : vector<8x1xi32> to vector<8x1xf32>
    %cst_30 = arith.constant 0.000000e+00 : f32
    %76 = vector.broadcast %cst_30 : f32 to vector<8x1xf32>
    %77 = arith.select %7, %75, %76 : vector<8x1xi1>, vector<8x1xf32>
    %c0_31 = arith.constant 0 : index
    %c0_32 = arith.constant 0 : index
    %78 = vector.load %arg13[%c0_31, %c0_32] : memref<8x1xf32, #tpu.memory_space<vmem>>, vector<8x1xf32>
    tpu.vector_store %arg13[%c0_31, %c0_32], %77 {strides = array<i32>} : memref<8x1xf32, #tpu.memory_space<vmem>>, vector<8x1xf32>,
    %cst_33 = arith.constant 0.000000e+00 : f32
    %79 = vector.broadcast %cst_33 : f32 to vector<8x1xf32>
    %c0_34 = arith.constant 0 : index
    %c0_35 = arith.constant 0 : index
    %80 = vector.load %arg11[%c0_34, %c0_35] : memref<8x1xf32, #tpu.memory_space<vmem>>, vector<8x1xf32>
    tpu.vector_store %arg11[%c0_34, %c0_35], %79 {strides = array<i32>} : memref<8x1xf32, #tpu.memory_space<vmem>>, vector<8x1xf32>,
    %cst_36 = arith.constant 0.000000e+00 : f32
    %81 = vector.broadcast %cst_36 : f32 to vector<8x1xf32>
    %c0_37 = arith.constant 0 : index
    %c0_38 = arith.constant 0 : index
    %82 = vector.load %arg12[%c0_37, %c0_38] : memref<8x1xf32, #tpu.memory_space<vmem>>, vector<8x1xf32>
    tpu.vector_store %arg12[%c0_37, %c0_38], %81 {strides = array<i32>} : memref<8x1xf32, #tpu.memory_space<vmem>>, vector<8x1xf32>,
    %c0_i32_39 = arith.constant 0 : i32
    %83 = vector.broadcast %c0_i32_39 : i32 to vector<8x128xi32>
    %c0_40 = arith.constant 0 : index
    %c0_41 = arith.constant 0 : index
    %84 = vector.load %arg8[%c0_40, %c0_41] : memref<8x128xi32, #tpu.memory_space<vmem>>, vector<8x128xi32>
    tpu.vector_store %arg8[%c0_40, %c0_41], %83 {strides = array<i32>} : memref<8x128xi32, #tpu.memory_space<vmem>>, vector<8x128xi32>,
    %c0_i32_42 = arith.constant 0 : i32
    %85 = vector.broadcast %c0_i32_42 : i32 to vector<8x128xi32>
    %c0_43 = arith.constant 0 : index
    %c0_44 = arith.constant 0 : index
    %86 = vector.load %arg9[%c0_43, %c0_44] : memref<8x128xi32, #tpu.memory_space<vmem>>, vector<8x128xi32>
    tpu.vector_store %arg9[%c0_43, %c0_44], %85 {strides = array<i32>} : memref<8x128xi32, #tpu.memory_space<vmem>>, vector<8x128xi32>,
    %c1_i32_45 = arith.constant 1 : i32
    %87 = vector.broadcast %c1_i32_45 : i32 to vector<1x1xi32>
    %c0_46 = arith.constant 0 : index
    %c0_47 = arith.constant 0 : index
    %88 = vector.load %arg10[%c0_46, %c0_47] : memref<1x1xi32, #tpu.memory_space<vmem>>, vector<1x1xi32>
    tpu.vector_store %arg10[%c0_46, %c0_47], %87 {strides = array<i32>} : memref<1x1xi32, #tpu.memory_space<vmem>>, vector<1x1xi32>,
    %c0_i32_48 = arith.constant 0 : i32
    %c12_i32 = arith.constant 12 : i32
    %89 = arith.addi %c0_i32_48, %c12_i32 : i32
    %c1_i32_49 = arith.constant 1 : i32
    scf.for %arg15 = %c0_i32_48 to %89 step %c1_i32_49  : i32 {
      %c0_51 = arith.constant 0 : index
      %c0_52 = arith.constant 0 : index
      %90 = vector.load %arg11[%c0_51, %c0_52] : memref<8x1xf32, #tpu.memory_space<vmem>>, vector<8x1xf32>
      %c0_53 = arith.constant 0 : index
      %c0_54 = arith.constant 0 : index
      %91 = vector.load %arg12[%c0_53, %c0_54] : memref<8x1xf32, #tpu.memory_space<vmem>>, vector<8x1xf32>
      %c0_55 = arith.constant 0 : index
      %c0_56 = arith.constant 0 : index
      %92 = vector.load %arg13[%c0_55, %c0_56] : memref<8x1xf32, #tpu.memory_space<vmem>>, vector<8x1xf32>
      %c0_57 = arith.constant 0 : index
      %c0_58 = arith.constant 0 : index
      %93 = vector.load %arg14[%c0_57, %c0_58] : memref<8x1xi32, #tpu.memory_space<vmem>>, vector<8x1xi32>
      %cst_59 = arith.constant dense<0.000000e+00> : vector<1xf32>
      %94 = vector.multi_reduction <add>, %92, %cst_59 [0] : vector<8x1xf32> to vector<1xf32>
      %95 = vector.shape_cast %94 : vector<1xf32> to vector<1x1xf32>
      %cst_60 = arith.constant 5.500000e+00 : f32
      %96 = vector.broadcast %cst_60 : f32 to vector<1x1xf32>
      %97 = arith.cmpf oge, %95, %96 : vector<1x1xf32>
      %c1_i32_61 = arith.constant 1 : i32
      %98 = arith.cmpi sge, %arg15, %c1_i32_61 : i32
      %99 = vector.broadcast %98 : i1 to vector<1x1xi1>
      %100 = arith.andi %97, %99 : vector<1x1xi1>
      %101 = vector.broadcast %93 : vector<8x1xi32> to vector<8x128xi32>
      %102 = arith.cmpi eq, %101, %1 : vector<8x128xi32>
      %103 = arith.extui %102 : vector<8x128xi1> to vector<8x128xi32>
      %104 = arith.sitofp %103 : vector<8x128xi32> to vector<8x128xf32>
      %c0_62 = arith.constant 0 : index
      %c0_63 = arith.constant 0 : index
      %105 = vector.load %arg2[%c0_62, %c0_63] : memref<128x64xf32, #tpu.memory_space<vmem>>, vector<128x64xf32>
      %cst_64 = arith.constant dense<0.000000e+00> : vector<8x64xf32>
      %106 = tpu.matmul %104, %105, %cst_64 {dimension_numbers = #tpu.dot_dimension_numbers<[1], [0], [0], [1], [0, 0, 1, 1], [], []>} : vector<8x128xf32>, vector<128x64xf32>, vector<8x64xf32> -> vector<8x64xf32>
      %107 = arith.index_cast %arg15 : i32 to index
      %c0_65 = arith.constant 0 : index
      %108 = vector.load %arg3[%107, %c0_65] : memref<32x64xf32, #tpu.memory_space<vmem>>, vector<1x64xf32>
      %109 = vector.broadcast %108 : vector<1x64xf32> to vector<8x64xf32>
      %110 = arith.addf %106, %109 : vector<8x64xf32>
      %111 = arith.addf %110, %67 : vector<8x64xf32>
      %112 = math.tanh %111 : vector<8x64xf32>
      %c0_66 = arith.constant 0 : index
      %c0_67 = arith.constant 0 : index
      %113 = vector.load %arg4[%c0_66, %c0_67] : memref<64x128xf32, #tpu.memory_space<vmem>>, vector<64x128xf32>
      %cst_68 = arith.constant dense<0.000000e+00> : vector<8x128xf32>
      %114 = tpu.matmul %112, %113, %cst_68 {dimension_numbers = #tpu.dot_dimension_numbers<[1], [0], [0], [1], [0, 0, 1, 1], [], []>} : vector<8x64xf32>, vector<64x128xf32>, vector<8x128xf32> -> vector<8x128xf32>
      %115 = vector.broadcast %68 : vector<1x128xf32> to vector<8x128xf32>
      %116 = arith.addf %114, %115 : vector<8x128xf32>
      %cst_69 = arith.constant dense<0xFF800000> : vector<8xf32>
      %117 = vector.multi_reduction <maximumf>, %116, %cst_69 [1] : vector<8x128xf32> to vector<8xf32>
      %118 = vector.shape_cast %117 : vector<8xf32> to vector<8x1xf32>
      %119 = vector.broadcast %118 : vector<8x1xf32> to vector<8x128xf32>
      %120 = arith.subf %116, %119 : vector<8x128xf32>
      %121 = math.exp %120 : vector<8x128xf32>
      %cst_70 = arith.constant dense<0.000000e+00> : vector<8xf32>
      %122 = vector.multi_reduction <add>, %121, %cst_70 [1] : vector<8x128xf32> to vector<8xf32>
      %123 = vector.shape_cast %122 : vector<8xf32> to vector<8x1xf32>
      %124 = math.log %123 : vector<8x1xf32>
      %125 = vector.broadcast %124 : vector<8x1xf32> to vector<8x128xf32>
      %126 = arith.subf %120, %125 : vector<8x128xf32>
      %cst_71 = arith.constant 5.000000e-01 : f32
      %127 = vector.broadcast %cst_71 : f32 to vector<8x1xf32>
      %128 = arith.cmpf ogt, %92, %127 : vector<8x1xf32>
      %c2_i32_72 = arith.constant 2 : i32
      %129 = arith.addi %arg15, %c2_i32_72 : i32
      %130 = vector.broadcast %129 : i32 to vector<8x1xi32>
      %131 = arith.cmpi slt, %69, %130 : vector<8x1xi32>
      %cst_73 = arith.constant 0.000000e+00 : f32
      %132 = vector.shape_cast %128 : vector<8x1xi1> to vector<8x1xi1>
      %133 = vector.broadcast %132 : vector<8x1xi1> to vector<8x128xi1>
      %134 = vector.broadcast %cst_73 : f32 to vector<8x128xf32>
      %135 = arith.select %133, %134, %126 : vector<8x128xi1>, vector<8x128xf32>
      %136 = vector.broadcast %98 : i1 to vector<8x1xi1>
      %137 = arith.andi %136, %131 : vector<8x1xi1>
      %cst_74 = arith.constant 0.000000e+00 : f32
      %138 = vector.shape_cast %137 : vector<8x1xi1> to vector<8x1xi1>
      %139 = vector.broadcast %138 : vector<8x1xi1> to vector<8x128xi1>
      %140 = vector.broadcast %cst_74 : f32 to vector<8x128xf32>
      %141 = arith.select %139, %140, %135 : vector<8x128xi1>, vector<8x128xf32>
      %cst_75 = arith.constant 6.000000e+00 : f32
      %142 = vector.broadcast %cst_75 : f32 to vector<8x1xf32>
      %143 = arith.addf %91, %142 : vector<8x1xf32>
      %cst_76 = arith.constant 6.000000e+00 : f32
      %144 = vector.broadcast %cst_76 : f32 to vector<8x1xf32>
      %145 = arith.divf %143, %144 : vector<8x1xf32>
      %146 = math.log %145 : vector<8x1xf32>
      %cst_77 = arith.constant 8.000000e-01 : f32
      %147 = vector.broadcast %cst_77 : f32 to vector<8x1xf32>
      %148 = arith.mulf %147, %146 : vector<8x1xf32>
      %149 = math.exp %148 : vector<8x1xf32>
      %150 = tpu.reciprocal %149 : vector<8x1xf32> -> vector<8x1xf32>
      %151 = vector.broadcast %90 : vector<8x1xf32> to vector<8x128xf32>
      %152 = arith.addf %151, %141 : vector<8x128xf32>
      %153 = vector.broadcast %150 : vector<8x1xf32> to vector<8x128xf32>
      %154 = arith.mulf %152, %153 : vector<8x128xf32>
      %155 = vector.broadcast %98 : i1 to vector<8x1xi1>
      %156 = arith.ori %155, %64 : vector<8x1xi1>
      %157 = arith.andi %7, %156 : vector<8x1xi1>
      %cst_78 = arith.constant -1.000000e+30 : f32
      %158 = vector.shape_cast %157 : vector<8x1xi1> to vector<8x1xi1>
      %159 = vector.broadcast %158 : vector<8x1xi1> to vector<8x128xi1>
      %160 = vector.broadcast %cst_78 : f32 to vector<8x128xf32>
      %161 = arith.select %159, %154, %160 : vector<8x128xi1>, vector<8x128xf32>
      %cst_79 = arith.constant 0.000000e+00 : f32
      %162 = vector.broadcast %cst_79 : f32 to vector<8x1xf32>
      %c0_i32_80 = arith.constant 0 : i32
      %163 = vector.broadcast %c0_i32_80 : i32 to vector<8x1xi32>
      %cst_81 = arith.constant dense<0xFF800000> : vector<8xf32>
      %164 = vector.multi_reduction <maximumf>, %161, %cst_81 [1] : vector<8x128xf32> to vector<8xf32>
      %165 = vector.shape_cast %164 : vector<8xf32> to vector<8x1xf32>
      %cst_82 = arith.constant -1.000000e+30 : f32
      %166 = vector.broadcast %cst_82 : f32 to vector<8x1xf32>
      %167 = arith.select %51, %165, %166 : vector<8x1xi1>, vector<8x1xf32>
      %cst_83 = arith.constant dense<0xFF800000> : vector<1xf32>
      %168 = vector.multi_reduction <maximumf>, %167, %cst_83 [0] : vector<8x1xf32> to vector<1xf32>
      %169 = vector.shape_cast %168 : vector<1xf32> to vector<1x1xf32>
      %170 = vector.shape_cast %169 : vector<1x1xf32> to vector<1x1xf32>
      %171 = vector.broadcast %170 : vector<1x1xf32> to vector<8x1xf32>
      %172 = arith.select %51, %171, %65 : vector<8x1xi1>, vector<8x1xf32>
      %cst_84 = arith.constant -1.000000e+30 : f32
      %173 = vector.broadcast %cst_84 : f32 to vector<8x1xf32>
      %174 = arith.select %53, %165, %173 : vector<8x1xi1>, vector<8x1xf32>
      %cst_85 = arith.constant dense<0xFF800000> : vector<1xf32>
      %175 = vector.multi_reduction <maximumf>, %174, %cst_85 [0] : vector<8x1xf32> to vector<1xf32>
      %176 = vector.shape_cast %175 : vector<1xf32> to vector<1x1xf32>
      %177 = vector.shape_cast %176 : vector<1x1xf32> to vector<1x1xf32>
      %178 = vector.broadcast %177 : vector<1x1xf32> to vector<8x1xf32>
      %179 = arith.select %53, %178, %172 : vector<8x1xi1>, vector<8x1xf32>
      %180 = vector.broadcast %179 : vector<8x1xf32> to vector<8x128xf32>
      %181 = arith.cmpf oeq, %161, %180 : vector<8x128xf32>
      %c1073741824_i32_86 = arith.constant 1073741824 : i32
      %182 = vector.broadcast %c1073741824_i32_86 : i32 to vector<8x128xi32>
      %183 = arith.select %181, %49, %182 : vector<8x128xi1>, vector<8x128xi32>
      %cst_87 = arith.constant dense<2147483647> : vector<8xi32>
      %184 = vector.multi_reduction <minsi>, %183, %cst_87 [1] : vector<8x128xi32> to vector<8xi32>
      %185 = vector.shape_cast %184 : vector<8xi32> to vector<8x1xi32>
      %c1073741824_i32_88 = arith.constant 1073741824 : i32
      %186 = vector.broadcast %c1073741824_i32_88 : i32 to vector<8x1xi32>
      %187 = arith.select %51, %185, %186 : vector<8x1xi1>, vector<8x1xi32>
      %cst_89 = arith.constant dense<2147483647> : vector<1xi32>
      %188 = vector.multi_reduction <minsi>, %187, %cst_89 [0] : vector<8x1xi32> to vector<1xi32>
      %189 = vector.shape_cast %188 : vector<1xi32> to vector<1x1xi32>
      %190 = vector.shape_cast %189 : vector<1x1xi32> to vector<1x1xi32>
      %191 = vector.broadcast %190 : vector<1x1xi32> to vector<8x1xi32>
      %192 = arith.select %51, %191, %66 : vector<8x1xi1>, vector<8x1xi32>
      %c1073741824_i32_90 = arith.constant 1073741824 : i32
      %193 = vector.broadcast %c1073741824_i32_90 : i32 to vector<8x1xi32>
      %194 = arith.select %53, %185, %193 : vector<8x1xi1>, vector<8x1xi32>
      %cst_91 = arith.constant dense<2147483647> : vector<1xi32>
      %195 = vector.multi_reduction <minsi>, %194, %cst_91 [0] : vector<8x1xi32> to vector<1xi32>
      %196 = vector.shape_cast %195 : vector<1xi32> to vector<1x1xi32>
      %197 = vector.shape_cast %196 : vector<1x1xi32> to vector<1x1xi32>
      %198 = vector.broadcast %197 : vector<1x1xi32> to vector<8x1xi32>
      %199 = arith.select %53, %198, %192 : vector<8x1xi1>, vector<8x1xi32>
      %200 = arith.select %56, %179, %162 : vector<8x1xi1>, vector<8x1xf32>
      %201 = arith.select %56, %199, %163 : vector<8x1xi1>, vector<8x1xi32>
      %202 = vector.broadcast %199 : vector<8x1xi32> to vector<8x128xi32>
      %203 = arith.cmpi eq, %49, %202 : vector<8x128xi32>
      %cst_92 = arith.constant -1.000000e+30 : f32
      %204 = vector.broadcast %cst_92 : f32 to vector<8x128xf32>
      %205 = arith.select %203, %204, %161 : vector<8x128xi1>, vector<8x128xf32>
      %cst_93 = arith.constant dense<0xFF800000> : vector<8xf32>
      %206 = vector.multi_reduction <maximumf>, %205, %cst_93 [1] : vector<8x128xf32> to vector<8xf32>
      %207 = vector.shape_cast %206 : vector<8xf32> to vector<8x1xf32>
      %cst_94 = arith.constant -1.000000e+30 : f32
      %208 = vector.broadcast %cst_94 : f32 to vector<8x1xf32>
      %209 = arith.select %51, %207, %208 : vector<8x1xi1>, vector<8x1xf32>
      %cst_95 = arith.constant dense<0xFF800000> : vector<1xf32>
      %210 = vector.multi_reduction <maximumf>, %209, %cst_95 [0] : vector<8x1xf32> to vector<1xf32>
      %211 = vector.shape_cast %210 : vector<1xf32> to vector<1x1xf32>
      %212 = vector.shape_cast %211 : vector<1x1xf32> to vector<1x1xf32>
      %213 = vector.broadcast %212 : vector<1x1xf32> to vector<8x1xf32>
      %214 = arith.select %51, %213, %65 : vector<8x1xi1>, vector<8x1xf32>
      %cst_96 = arith.constant -1.000000e+30 : f32
      %215 = vector.broadcast %cst_96 : f32 to vector<8x1xf32>
      %216 = arith.select %53, %207, %215 : vector<8x1xi1>, vector<8x1xf32>
      %cst_97 = arith.constant dense<0xFF800000> : vector<1xf32>
      %217 = vector.multi_reduction <maximumf>, %216, %cst_97 [0] : vector<8x1xf32> to vector<1xf32>
      %218 = vector.shape_cast %217 : vector<1xf32> to vector<1x1xf32>
      %219 = vector.shape_cast %218 : vector<1x1xf32> to vector<1x1xf32>
      %220 = vector.broadcast %219 : vector<1x1xf32> to vector<8x1xf32>
      %221 = arith.select %53, %220, %214 : vector<8x1xi1>, vector<8x1xf32>
      %222 = vector.broadcast %221 : vector<8x1xf32> to vector<8x128xf32>
      %223 = arith.cmpf oeq, %205, %222 : vector<8x128xf32>
      %c1073741824_i32_98 = arith.constant 1073741824 : i32
      %224 = vector.broadcast %c1073741824_i32_98 : i32 to vector<8x128xi32>
      %225 = arith.select %223, %49, %224 : vector<8x128xi1>, vector<8x128xi32>
      %cst_99 = arith.constant dense<2147483647> : vector<8xi32>
      %226 = vector.multi_reduction <minsi>, %225, %cst_99 [1] : vector<8x128xi32> to vector<8xi32>
      %227 = vector.shape_cast %226 : vector<8xi32> to vector<8x1xi32>
      %c1073741824_i32_100 = arith.constant 1073741824 : i32
      %228 = vector.broadcast %c1073741824_i32_100 : i32 to vector<8x1xi32>
      %229 = arith.select %51, %227, %228 : vector<8x1xi1>, vector<8x1xi32>
      %cst_101 = arith.constant dense<2147483647> : vector<1xi32>
      %230 = vector.multi_reduction <minsi>, %229, %cst_101 [0] : vector<8x1xi32> to vector<1xi32>
      %231 = vector.shape_cast %230 : vector<1xi32> to vector<1x1xi32>
      %232 = vector.shape_cast %231 : vector<1x1xi32> to vector<1x1xi32>
      %233 = vector.broadcast %232 : vector<1x1xi32> to vector<8x1xi32>
      %234 = arith.select %51, %233, %66 : vector<8x1xi1>, vector<8x1xi32>
      %c1073741824_i32_102 = arith.constant 1073741824 : i32
      %235 = vector.broadcast %c1073741824_i32_102 : i32 to vector<8x1xi32>
      %236 = arith.select %53, %227, %235 : vector<8x1xi1>, vector<8x1xi32>
      %cst_103 = arith.constant dense<2147483647> : vector<1xi32>
      %237 = vector.multi_reduction <minsi>, %236, %cst_103 [0] : vector<8x1xi32> to vector<1xi32>
      %238 = vector.shape_cast %237 : vector<1xi32> to vector<1x1xi32>
      %239 = vector.shape_cast %238 : vector<1x1xi32> to vector<1x1xi32>
      %240 = vector.broadcast %239 : vector<1x1xi32> to vector<8x1xi32>
      %241 = arith.select %53, %240, %234 : vector<8x1xi1>, vector<8x1xi32>
      %242 = arith.select %59, %221, %200 : vector<8x1xi1>, vector<8x1xf32>
      %243 = arith.select %59, %241, %201 : vector<8x1xi1>, vector<8x1xi32>
      %244 = vector.broadcast %241 : vector<8x1xi32> to vector<8x128xi32>
      %245 = arith.cmpi eq, %49, %244 : vector<8x128xi32>
      %cst_104 = arith.constant -1.000000e+30 : f32
      %246 = vector.broadcast %cst_104 : f32 to vector<8x128xf32>
      %247 = arith.select %245, %246, %205 : vector<8x128xi1>, vector<8x128xf32>
      %cst_105 = arith.constant dense<0xFF800000> : vector<8xf32>
      %248 = vector.multi_reduction <maximumf>, %247, %cst_105 [1] : vector<8x128xf32> to vector<8xf32>
      %249 = vector.shape_cast %248 : vector<8xf32> to vector<8x1xf32>
      %cst_106 = arith.constant -1.000000e+30 : f32
      %250 = vector.broadcast %cst_106 : f32 to vector<8x1xf32>
      %251 = arith.select %51, %249, %250 : vector<8x1xi1>, vector<8x1xf32>
      %cst_107 = arith.constant dense<0xFF800000> : vector<1xf32>
      %252 = vector.multi_reduction <maximumf>, %251, %cst_107 [0] : vector<8x1xf32> to vector<1xf32>
      %253 = vector.shape_cast %252 : vector<1xf32> to vector<1x1xf32>
      %254 = vector.shape_cast %253 : vector<1x1xf32> to vector<1x1xf32>
      %255 = vector.broadcast %254 : vector<1x1xf32> to vector<8x1xf32>
      %256 = arith.select %51, %255, %65 : vector<8x1xi1>, vector<8x1xf32>
      %cst_108 = arith.constant -1.000000e+30 : f32
      %257 = vector.broadcast %cst_108 : f32 to vector<8x1xf32>
      %258 = arith.select %53, %249, %257 : vector<8x1xi1>, vector<8x1xf32>
      %cst_109 = arith.constant dense<0xFF800000> : vector<1xf32>
      %259 = vector.multi_reduction <maximumf>, %258, %cst_109 [0] : vector<8x1xf32> to vector<1xf32>
      %260 = vector.shape_cast %259 : vector<1xf32> to vector<1x1xf32>
      %261 = vector.shape_cast %260 : vector<1x1xf32> to vector<1x1xf32>
      %262 = vector.broadcast %261 : vector<1x1xf32> to vector<8x1xf32>
      %263 = arith.select %53, %262, %256 : vector<8x1xi1>, vector<8x1xf32>
      %264 = vector.broadcast %263 : vector<8x1xf32> to vector<8x128xf32>
      %265 = arith.cmpf oeq, %247, %264 : vector<8x128xf32>
      %c1073741824_i32_110 = arith.constant 1073741824 : i32
      %266 = vector.broadcast %c1073741824_i32_110 : i32 to vector<8x128xi32>
      %267 = arith.select %265, %49, %266 : vector<8x128xi1>, vector<8x128xi32>
      %cst_111 = arith.constant dense<2147483647> : vector<8xi32>
      %268 = vector.multi_reduction <minsi>, %267, %cst_111 [1] : vector<8x128xi32> to vector<8xi32>
      %269 = vector.shape_cast %268 : vector<8xi32> to vector<8x1xi32>
      %c1073741824_i32_112 = arith.constant 1073741824 : i32
      %270 = vector.broadcast %c1073741824_i32_112 : i32 to vector<8x1xi32>
      %271 = arith.select %51, %269, %270 : vector<8x1xi1>, vector<8x1xi32>
      %cst_113 = arith.constant dense<2147483647> : vector<1xi32>
      %272 = vector.multi_reduction <minsi>, %271, %cst_113 [0] : vector<8x1xi32> to vector<1xi32>
      %273 = vector.shape_cast %272 : vector<1xi32> to vector<1x1xi32>
      %274 = vector.shape_cast %273 : vector<1x1xi32> to vector<1x1xi32>
      %275 = vector.broadcast %274 : vector<1x1xi32> to vector<8x1xi32>
      %276 = arith.select %51, %275, %66 : vector<8x1xi1>, vector<8x1xi32>
      %c1073741824_i32_114 = arith.constant 1073741824 : i32
      %277 = vector.broadcast %c1073741824_i32_114 : i32 to vector<8x1xi32>
      %278 = arith.select %53, %269, %277 : vector<8x1xi1>, vector<8x1xi32>
      %cst_115 = arith.constant dense<2147483647> : vector<1xi32>
      %279 = vector.multi_reduction <minsi>, %278, %cst_115 [0] : vector<8x1xi32> to vector<1xi32>
      %280 = vector.shape_cast %279 : vector<1xi32> to vector<1x1xi32>
      %281 = vector.shape_cast %280 : vector<1x1xi32> to vector<1x1xi32>
      %282 = vector.broadcast %281 : vector<1x1xi32> to vector<8x1xi32>
      %283 = arith.select %53, %282, %276 : vector<8x1xi1>, vector<8x1xi32>
      %284 = arith.select %62, %263, %242 : vector<8x1xi1>, vector<8x1xf32>
      %285 = arith.select %62, %283, %243 : vector<8x1xi1>, vector<8x1xi32>
      %286 = vector.broadcast %98 : i1 to vector<8x1xi1>
      %287 = arith.andi %286, %131 : vector<8x1xi1>
      %c0_i32_116 = arith.constant 0 : i32
      %288 = vector.broadcast %c0_i32_116 : i32 to vector<8x1xi32>
      %289 = arith.select %287, %288, %285 : vector<8x1xi1>, vector<8x1xi32>
      %290 = vector.broadcast %98 : i1 to vector<8x1xi1>
      %291 = arith.andi %290, %128 : vector<8x1xi1>
      %c0_i32_117 = arith.constant 0 : i32
      %292 = vector.broadcast %c0_i32_117 : i32 to vector<8x1xi32>
      %293 = arith.select %291, %292, %289 : vector<8x1xi1>, vector<8x1xi32>
      %c0_i32_118 = arith.constant 0 : i32
      %294 = vector.broadcast %c0_i32_118 : i32 to vector<8x1xi32>
      %c128_i32_119 = arith.constant 128 : i32
      %295 = vector.broadcast %c128_i32_119 : i32 to vector<8x1xi32>
      %296 = arith.cmpi sge, %293, %295 : vector<8x1xi32>
      %297 = arith.extui %296 : vector<8x1xi1> to vector<8x1xi32>
      %298 = arith.addi %294, %297 : vector<8x1xi32>
      %c256_i32 = arith.constant 256 : i32
      %299 = vector.broadcast %c256_i32 : i32 to vector<8x1xi32>
      %300 = arith.cmpi sge, %293, %299 : vector<8x1xi32>
      %301 = arith.extui %300 : vector<8x1xi1> to vector<8x1xi32>
      %302 = arith.addi %298, %301 : vector<8x1xi32>
      %c128_i32_120 = arith.constant 128 : i32
      %303 = vector.broadcast %c128_i32_120 : i32 to vector<8x1xi32>
      %304 = arith.muli %302, %303 : vector<8x1xi32>
      %305 = arith.subi %293, %304 : vector<8x1xi32>
      %306 = arith.addi %43, %302 : vector<8x1xi32>
      %cst_121 = arith.constant 0.000000e+00 : f32
      %307 = vector.shape_cast %91 : vector<8x1xf32> to vector<8x1xf32>
      %308 = vector.broadcast %307 : vector<8x1xf32> to vector<8x8xf32>
      %309 = vector.broadcast %cst_121 : f32 to vector<8x8xf32>
      %310 = arith.select %5, %308, %309 : vector<8x8xi1>, vector<8x8xf32>
      %cst_122 = arith.constant dense<0.000000e+00> : vector<8xf32>
      %311 = vector.multi_reduction <add>, %310, %cst_122 [0] : vector<8x8xf32> to vector<8xf32>
      %312 = vector.shape_cast %311 : vector<8xf32> to vector<1x8xf32>
      %cst_123 = arith.constant 0.000000e+00 : f32
      %313 = vector.shape_cast %92 : vector<8x1xf32> to vector<8x1xf32>
      %314 = vector.broadcast %313 : vector<8x1xf32> to vector<8x8xf32>
      %315 = vector.broadcast %cst_123 : f32 to vector<8x8xf32>
      %316 = arith.select %5, %314, %315 : vector<8x8xi1>, vector<8x8xf32>
      %cst_124 = arith.constant dense<0.000000e+00> : vector<8xf32>
      %317 = vector.multi_reduction <add>, %316, %cst_124 [0] : vector<8x8xf32> to vector<8xf32>
      %318 = vector.shape_cast %317 : vector<8xf32> to vector<1x8xf32>
      %319 = vector.broadcast %306 : vector<8x1xi32> to vector<8x8xi32>
      %320 = arith.cmpi eq, %3, %319 : vector<8x8xi32>
      %cst_125 = arith.constant 0.000000e+00 : f32
      %321 = vector.shape_cast %312 : vector<1x8xf32> to vector<1x8xf32>
      %322 = vector.broadcast %321 : vector<1x8xf32> to vector<8x8xf32>
      %323 = vector.broadcast %cst_125 : f32 to vector<8x8xf32>
      %324 = arith.select %320, %322, %323 : vector<8x8xi1>, vector<8x8xf32>
      %cst_126 = arith.constant dense<0.000000e+00> : vector<8xf32>
      %325 = vector.multi_reduction <add>, %324, %cst_126 [1] : vector<8x8xf32> to vector<8xf32>
      %326 = vector.shape_cast %325 : vector<8xf32> to vector<8x1xf32>
      %cst_127 = arith.constant 0.000000e+00 : f32
      %327 = vector.shape_cast %318 : vector<1x8xf32> to vector<1x8xf32>
      %328 = vector.broadcast %327 : vector<1x8xf32> to vector<8x8xf32>
      %329 = vector.broadcast %cst_127 : f32 to vector<8x8xf32>
      %330 = arith.select %320, %328, %329 : vector<8x8xi1>, vector<8x8xf32>
      %cst_128 = arith.constant dense<0.000000e+00> : vector<8xf32>
      %331 = vector.multi_reduction <add>, %330, %cst_128 [1] : vector<8x8xf32> to vector<8xf32>
      %332 = vector.shape_cast %331 : vector<8xf32> to vector<8x1xf32>
      %c0_i32_129 = arith.constant 0 : i32
      %333 = vector.broadcast %c0_i32_129 : i32 to vector<8x1xi32>
      %334 = arith.cmpi ne, %305, %333 : vector<8x1xi32>
      %335 = arith.extui %334 : vector<8x1xi1> to vector<8x1xi32>
      %336 = arith.sitofp %335 : vector<8x1xi32> to vector<8x1xf32>
      %337 = arith.addf %326, %336 : vector<8x1xf32>
      %c2_i32_130 = arith.constant 2 : i32
      %338 = vector.broadcast %c2_i32_130 : i32 to vector<8x1xi32>
      %339 = arith.cmpi eq, %305, %338 : vector<8x1xi32>
      %340 = arith.extui %339 : vector<8x1xi1> to vector<8x1xi32>
      %341 = arith.sitofp %340 : vector<8x1xi32> to vector<8x1xf32>
      %342 = arith.maximumf %332, %341 : vector<8x1xf32>
      %cst_131 = arith.constant 0.000000e+00 : f32
      %343 = vector.broadcast %cst_131 : f32 to vector<8x1xf32>
      %344 = arith.select %7, %342, %343 : vector<8x1xi1>, vector<8x1xf32>
      %345 = vector.shape_cast %100 : vector<1x1xi1> to vector<1x1xi1>
      %346 = vector.broadcast %345 : vector<1x1xi1> to vector<8x1xi1>
      %347 = arith.select %346, %90, %284 : vector<8x1xi1>, vector<8x1xf32>
      %c0_132 = arith.constant 0 : index
      %c0_133 = arith.constant 0 : index
      %348 = vector.load %arg11[%c0_132, %c0_133] : memref<8x1xf32, #tpu.memory_space<vmem>>, vector<8x1xf32>
      tpu.vector_store %arg11[%c0_132, %c0_133], %347 {strides = array<i32>} : memref<8x1xf32, #tpu.memory_space<vmem>>, vector<8x1xf32>,
      %349 = vector.shape_cast %100 : vector<1x1xi1> to vector<1x1xi1>
      %350 = vector.broadcast %349 : vector<1x1xi1> to vector<8x1xi1>
      %351 = arith.select %350, %91, %337 : vector<8x1xi1>, vector<8x1xf32>
      %c0_134 = arith.constant 0 : index
      %c0_135 = arith.constant 0 : index
      %352 = vector.load %arg12[%c0_134, %c0_135] : memref<8x1xf32, #tpu.memory_space<vmem>>, vector<8x1xf32>
      tpu.vector_store %arg12[%c0_134, %c0_135], %351 {strides = array<i32>} : memref<8x1xf32, #tpu.memory_space<vmem>>, vector<8x1xf32>,
      %353 = vector.shape_cast %100 : vector<1x1xi1> to vector<1x1xi1>
      %354 = vector.broadcast %353 : vector<1x1xi1> to vector<8x1xi1>
      %355 = arith.select %354, %92, %344 : vector<8x1xi1>, vector<8x1xf32>
      %c0_136 = arith.constant 0 : index
      %c0_137 = arith.constant 0 : index
      %356 = vector.load %arg13[%c0_136, %c0_137] : memref<8x1xf32, #tpu.memory_space<vmem>>, vector<8x1xf32>
      tpu.vector_store %arg13[%c0_136, %c0_137], %355 {strides = array<i32>} : memref<8x1xf32, #tpu.memory_space<vmem>>, vector<8x1xf32>,
      %357 = vector.shape_cast %100 : vector<1x1xi1> to vector<1x1xi1>
      %358 = vector.broadcast %357 : vector<1x1xi1> to vector<8x1xi1>
      %359 = arith.select %358, %93, %305 : vector<8x1xi1>, vector<8x1xi32>
      %c0_138 = arith.constant 0 : index
      %c0_139 = arith.constant 0 : index
      %360 = vector.load %arg14[%c0_138, %c0_139] : memref<8x1xi32, #tpu.memory_space<vmem>>, vector<8x1xi32>
      tpu.vector_store %arg14[%c0_138, %c0_139], %359 {strides = array<i32>} : memref<8x1xi32, #tpu.memory_space<vmem>>, vector<8x1xi32>,
      %cst_140 = arith.constant dense<true> : vector<1x1xi1>
      %361 = arith.xori %100, %cst_140 : vector<1x1xi1>
      %362 = vector.broadcast %arg15 : i32 to vector<8x128xi32>
      %363 = arith.cmpi eq, %2, %362 : vector<8x128xi32>
      %364 = vector.broadcast %361 : vector<1x1xi1> to vector<8x128xi1>
      %365 = arith.andi %363, %364 : vector<8x128xi1>
      %c0_141 = arith.constant 0 : index
      %c0_142 = arith.constant 0 : index
      %366 = vector.load %arg8[%c0_141, %c0_142] : memref<8x128xi32, #tpu.memory_space<vmem>>, vector<8x128xi32>
      %367 = vector.shape_cast %302 : vector<8x1xi32> to vector<8x1xi32>
      %368 = vector.broadcast %367 : vector<8x1xi32> to vector<8x128xi32>
      %369 = arith.select %365, %368, %366 : vector<8x128xi1>, vector<8x128xi32>
      %c0_143 = arith.constant 0 : index
      %c0_144 = arith.constant 0 : index
      %370 = vector.load %arg8[%c0_143, %c0_144] : memref<8x128xi32, #tpu.memory_space<vmem>>, vector<8x128xi32>
      tpu.vector_store %arg8[%c0_143, %c0_144], %369 {strides = array<i32>} : memref<8x128xi32, #tpu.memory_space<vmem>>, vector<8x128xi32>,
      %c0_145 = arith.constant 0 : index
      %c0_146 = arith.constant 0 : index
      %371 = vector.load %arg9[%c0_145, %c0_146] : memref<8x128xi32, #tpu.memory_space<vmem>>, vector<8x128xi32>
      %372 = vector.shape_cast %305 : vector<8x1xi32> to vector<8x1xi32>
      %373 = vector.broadcast %372 : vector<8x1xi32> to vector<8x128xi32>
      %374 = arith.select %365, %373, %371 : vector<8x128xi1>, vector<8x128xi32>
      %c0_147 = arith.constant 0 : index
      %c0_148 = arith.constant 0 : index
      %375 = vector.load %arg9[%c0_147, %c0_148] : memref<8x128xi32, #tpu.memory_space<vmem>>, vector<8x128xi32>
      tpu.vector_store %arg9[%c0_147, %c0_148], %374 {strides = array<i32>} : memref<8x128xi32, #tpu.memory_space<vmem>>, vector<8x128xi32>,
      %c0_149 = arith.constant 0 : index
      %c0_150 = arith.constant 0 : index
      %376 = vector.load %arg10[%c0_149, %c0_150] : memref<1x1xi32, #tpu.memory_space<vmem>>, vector<1x1xi32>
      %c0_i32_151 = arith.constant 0 : i32
      %377 = vector.broadcast %c0_i32_151 : i32 to vector<1x1xi32>
      %c2_i32_152 = arith.constant 2 : i32
      %378 = arith.addi %arg15, %c2_i32_152 : i32
      %379 = vector.broadcast %378 : i32 to vector<1x1xi32>
      %380 = arith.addi %377, %379 : vector<1x1xi32>
      %381 = arith.select %100, %376, %380 : vector<1x1xi1>, vector<1x1xi32>
      %c0_153 = arith.constant 0 : index
      %c0_154 = arith.constant 0 : index
      %382 = vector.load %arg10[%c0_153, %c0_154] : memref<1x1xi32, #tpu.memory_space<vmem>>, vector<1x1xi32>
      tpu.vector_store %arg10[%c0_153, %c0_154], %381 {strides = array<i32>} : memref<1x1xi32, #tpu.memory_space<vmem>>, vector<1x1xi32>,
    }
    %c12_i32_50 = arith.constant 12 : i32
    return
  }
  func.func @transform_0(%arg0: i32) -> (i32, i32) {
    %c0_i32 = arith.constant 0 : i32
    %c0_i32_0 = arith.constant 0 : i32
    %c0_i32_1 = arith.constant 0 : i32
    return %c0_i32, %c0_i32_0 : i32, i32
  }
  func.func @transform_1(%arg0: i32) -> (i32, i32) {
    %c0_i32 = arith.constant 0 : i32
    %c0_i32_0 = arith.constant 0 : i32
    %c0_i32_1 = arith.constant 0 : i32
    return %c0_i32, %c0_i32_0 : i32, i32
  }
  func.func @transform_2(%arg0: i32) -> (i32, i32) {
    %c0_i32 = arith.constant 0 : i32
    %c0_i32_0 = arith.constant 0 : i32
    %c0_i32_1 = arith.constant 0 : i32
    return %c0_i32, %c0_i32_0 : i32, i32
  }
  func.func @transform_3(%arg0: i32) -> (i32, i32) {
    %c0_i32 = arith.constant 0 : i32
    %c0_i32_0 = arith.constant 0 : i32
    %c0_i32_1 = arith.constant 0 : i32
    return %c0_i32, %c0_i32_0 : i32, i32
  }
  func.func @transform_4(%arg0: i32) -> (i32, i32) {
    %c0_i32 = arith.constant 0 : i32
    %c0_i32_0 = arith.constant 0 : i32
    %c0_i32_1 = arith.constant 0 : i32
    return %c0_i32, %c0_i32_0 : i32, i32
  }
  func.func @transform_5(%arg0: i32) -> (i32, i32) {
    %c0_i32 = arith.constant 0 : i32
    %c0_i32_0 = arith.constant 0 : i32
    %c0_i32_1 = arith.constant 0 : i32
    return %c0_i32, %c0_i32_0 : i32, i32
  }
  func.func @transform_6(%arg0: i32) -> (i32, i32) {
    %c0_i32 = arith.constant 0 : i32
    %c0_i32_0 = arith.constant 0 : i32
    %c0_i32_1 = arith.constant 0 : i32
    return %c0_i32, %c0_i32_0 : i32, i32
  }
  func.func @transform_7(%arg0: i32) -> (i32, i32) {
    %c0_i32 = arith.constant 0 : i32
    %c0_i32_0 = arith.constant 0 : i32
    %c0_i32_1 = arith.constant 0 : i32
    return %c0_i32, %c0_i32_0 : i32, i32
  }
  func.func @transform_8(%arg0: i32) -> (i32, i32) {
    %c0_i32 = arith.constant 0 : i32
    %c0_i32_0 = arith.constant 0 : i32
    %c0_i32_1 = arith.constant 0 : i32
    return %c0_i32, %c0_i32_0 : i32, i32
  }
  func.func @transform_9(%arg0: i32) -> (i32, i32) {
    %c0_i32 = arith.constant 0 : i32
    %c0_i32_0 = arith.constant 0 : i32
    %c0_i32_1 = arith.constant 0 : i32
    return %c0_i32, %c0_i32_0 : i32, i32
  }
}

</mosaic_0001>

<llo_original>
// kernel: run.2
$region0: #{run.2}
  #allocation0 [shape = 'u32[]', space=smem, size = 0x4, offset = 0x4, fixed_abs, tag = 'smem constant byte address 0x4 - core index']
  #allocation1 [shape = 'u32[144,128]{1,0:T(1,128)}', space=vmem, size = 0x12000, scoped, tag = 'internal scratch']
  %s0 = inlined_call_operand.vmem [shape: f32[16,64], index: 0, kind: input, shape index: {}]
  %s1 = inlined_call_operand.vmem [shape: f32[8,16], index: 1, kind: input, shape index: {}]
  %s2 = inlined_call_operand.vmem [shape: f32[64,64], index: 2, kind: input, shape index: {}]
  %s3 = inlined_call_operand.vmem [shape: f32[1,64], index: 3, kind: input, shape index: {}]
  %s4 = inlined_call_operand.vmem [shape: f32[64,64], index: 4, kind: input, shape index: {}]
  %s5 = inlined_call_operand.vmem [shape: f32[1,64], index: 5, kind: input, shape index: {}]
  %s6 = inlined_call_operand.vmem [shape: f32[128,64], index: 6, kind: input, shape index: {}]
  %s7 = inlined_call_operand.vmem [shape: f32[32,64], index: 7, kind: input, shape index: {}]
  %s8 = inlined_call_operand.vmem [shape: f32[64,64], index: 8, kind: input, shape index: {}]
  %s9 = inlined_call_operand.vmem [shape: f32[8,64], index: 9, kind: output, shape index: {0}]
  %s10 = inlined_call_operand.vmem [shape: f32[128,64], index: 10, kind: output, shape index: {1}]
  %s11 = inlined_call_operand.vmem [shape: f32[32,64], index: 11, kind: output, shape index: {2}]
  %12 = xla_tuple %s9, %s10, %s11
  %s13 = sld [smem:[#allocation0]]
  $region62: #{run.2} parent=0
    _
  %s15 = ssub.s32 1, %s13
  %s16 = scalar_select 0, %s15, %s13
  // Predicated region
  $region2: #{run.2} parent=0 // pred_check
    _
  $region3: #{run.2} parent=0 // pred_check_branch
    %18 = sbr.rel (0) target = $region5
  $region4: #{run.2} parent=0 // pred_region
    _
  $region5: #{run.2} parent=0 // pred_fallthru
    _
  // Predicated region
  $region6: #{run.2} parent=0 // pred_check
    _
  $region7: #{run.2} parent=0 // pred_check_branch
    %20 = sbr.rel (0) target = $region9
  $region8: #{run.2} parent=0 // pred_region
    _
  $region9: #{run.2} parent=0 // pred_fallthru
    _
  // Predicated region
  $region10: #{run.2} parent=0 // pred_check
    _
  $region11: #{run.2} parent=0 // pred_check_branch
    %22 = sbr.rel (0) target = $region13
  $region12: #{run.2} parent=0 // pred_region
    _
  $region13: #{run.2} parent=0 // pred_fallthru
    _
  // Predicated region
  $region14: #{run.2} parent=0 // pred_check
    _
  $region15: #{run.2} parent=0 // pred_check_branch
    %24 = sbr.rel (0) target = $region17
  $region16: #{run.2} parent=0 // pred_region
    _
  $region17: #{run.2} parent=0 // pred_fallthru
    _
  // Predicated region
  $region18: #{run.2} parent=0 // pred_check
    _
  $region19: #{run.2} parent=0 // pred_check_branch
    %26 = sbr.rel (0) target = $region21
  $region20: #{run.2} parent=0 // pred_region
    _
  $region21: #{run.2} parent=0 // pred_fallthru
    _
  // Predicated region
  $region22: #{run.2} parent=0 // pred_check
    _
  $region23: #{run.2} parent=0 // pred_check_branch
    %28 = sbr.rel (0) target = $region25
  $region24: #{run.2} parent=0 // pred_region
    _
  $region25: #{run.2} parent=0 // pred_fallthru
    _
  // Predicated region
  $region26: #{run.2} parent=0 // pred_check
    _
  $region27: #{run.2} parent=0 // pred_check_branch
    %30 = sbr.rel (0) target = $region29
  $region28: #{run.2} parent=0 // pred_region
    _
  $region29: #{run.2} parent=0 // pred_fallthru
    _
  // Predicated region
  $region30: #{run.2} parent=0 // pred_check
    _
  $region31: #{run.2} parent=0 // pred_check_branch
    %32 = sbr.rel (0) target = $region33
  $region32: #{run.2} parent=0 // pred_region
    _
  $region33: #{run.2} parent=0 // pred_fallthru
    _
  // Predicated region
  $region34: #{run.2} parent=0 // pred_check
    _
  $region35: #{run.2} parent=0 // pred_check_branch
    %34 = sbr.rel (0) target = $region37
  $region36: #{run.2} parent=0 // pred_region
    _
  $region37: #{run.2} parent=0 // pred_fallthru
    _
  %v35 = vld [vmem:[%s0] sm:$0xff]
  %v36 = vld [vmem:[%s0 + $0x8] sm:$0xff]
  %v37 = vld [vmem:[%s2] sm:$0xff]
  %v38 = vld [vmem:[%s2 + $0x8] sm:$0xff]
  %v39 = vld [vmem:[%s2 + $0x10] sm:$0xff]
  %v40 = vld [vmem:[%s2 + $0x18] sm:$0xff]
  %v41 = vld [vmem:[%s2 + $0x20] sm:$0xff]
  %v42 = vld [vmem:[%s2 + $0x28] sm:$0xff]
  %v43 = vld [vmem:[%s2 + $0x30] sm:$0xff]
  %v44 = vld [vmem:[%s2 + $0x38] sm:$0xff]
  %v45 = vld [vmem:[%s3] sm:$0x1]
  %v47 = vlaneseq
  %v48 = vshrl.u32 %v47, 7
  %v49 = vsub.s32 0, %v48
  %v50 = vrot.slane %v45, %v49
  %vm52 = vcmask 523264
  %v54 = vsel %vm52, %v35, 0
  %v57 = vsel %vm52, %v36, 0
  %59 = vmatprep.subr.mxu0 0.0
  %60 = vmatpush1.msra.mxu0 %v37
  %61 = vmatprep.subr.mxu0 0.0
  %62 = vmatpush1.msra.mxu0 %v38
  %63 = vmatprep.subr.mxu0 0.0
  %64 = vmatpush1.msra.mxu0 %v39
  %65 = vmatprep.subr.mxu0 0.0
  %66 = vmatpush1.msra.mxu0 %v40
  %67 = vmatprep.subr.mxu0 0.0
  %68 = vmatpush1.msra.mxu0 %v41
  %69 = vmatprep.subr.mxu0 0.0
  %70 = vmatpush1.msra.mxu0 %v42
  %71 = vmatprep.subr.mxu0 0.0
  %72 = vmatpush1.msra.mxu0 %v43
  %73 = vmatprep.subr.mxu0 0.0
  %74 = vmatpush1.msra.mxu0 %v44
  %75 = vmatprep.subr.mxu0 0.0
  %76 = vmatpush1.msra.mxu0 0.0
  %77 = vmatprep.subr.mxu0 0.0
  %78 = vmatpush1.msra.mxu0 0.0
  %79 = vmatprep.subr.mxu0 0.0
  %80 = vmatpush1.msra.mxu0 0.0
  %81 = vmatprep.subr.mxu0 0.0
  %82 = vmatpush1.msra.mxu0 0.0
  %83 = vmatprep.subr.mxu0 0.0
  %84 = vmatpush1.msra.mxu0 0.0
  %85 = vmatprep.subr.mxu0 0.0
  %86 = vmatpush1.msra.mxu0 0.0
  %87 = vmatprep.subr.mxu0 0.0
  %88 = vmatpush1.msra.mxu0 0.0
  %89 = vmatprep.subr.mxu0 0.0
  %90 = vmatpush1.msra.mxu0 0.0
  %91 = vmatprep.subr.mxu0 0.0
  %92 = vmatpush1.msra.mxu0 0.0
  %93 = vmatprep.subr.mxu0 0.0
  %94 = vmatpush1.msra.mxu0 0.0
  %95 = vmatprep.subr.mxu0 0.0
  %96 = vmatpush1.msra.mxu0 0.0
  %97 = vmatprep.subr.mxu0 0.0
  %98 = vmatpush1.msra.mxu0 0.0
  %99 = vmatprep.subr.mxu0 0.0
  %100 = vmatpush1.msra.mxu0 0.0
  %101 = vmatprep.subr.mxu0 0.0
  %102 = vmatpush1.msra.mxu0 0.0
  %103 = vmatprep.subr.mxu0 0.0
  %104 = vmatpush1.msra.mxu0 0.0
  %105 = vmatprep.subr.mxu0 0.0
  %106 = vmatpush1.msra.mxu0 0.0
  %107 = vmatprep.subr.mxu0 0.0
  %108 = vmatpush1.msra.mxu0 0.0
  %109 = vmatprep.subr.mxu0 0.0
  %110 = vmatpush1.msra.mxu0 0.0
  %111 = vmatprep.subr.mxu0 0.0
  %112 = vmatpush1.msra.mxu0 0.0
  %113 = vmatprep.subr.mxu0 0.0
  %114 = vmatpush1.msra.mxu0 0.0
  %115 = vmatprep.subr.mxu0 0.0
  %116 = vmatpush1.msra.mxu0 0.0
  %117 = vmatprep.subr.mxu0 0.0
  %118 = vmatpush1.msra.mxu0 0.0
  %119 = vmatprep.subr.mxu0 0.0
  %120 = vmatpush1.msra.mxu0 0.0
  %121 = vmatprep.subr.mxu0 0.0
  %122 = vmatpush1.msra.mxu0 0.0
  %123 = vmatprep.mubr.f32.mxu0 0.0
  %124 = vmatmul.mubr.f32.gmra.mrb[0].mxu0 %v54
  %v125 = vpop.f32.mrb[0].mxu0
  %v126 = vadd.f32 %v50, %v125
  %v127 = vpop.f32.mrb[0].mxu0
  %128 = vmatprep.mubr.f32.mxu0 0.0
  %129 = vmatmul.mubr.f32.gmra.mrb[0].mxu0 %v57
  %v130 = vpop.f32.mrb[0].mxu0
  %v131 = vadd.f32 %v50, %v130
  %v132 = vpop.f32.mrb[0].mxu0
  %133 = vdwg.mxu0
  %v134 = vtanh.pop %v126
  %v135 = vtanh.pop %v131
  %v136 = vld [vmem:[%s1] sm:$0xff]
  %vm137 = vcmask 130048
  %v139 = vsel %vm137, %v136, 0
  %141 = vmatprep.subr.mxu0 0.0
  %142 = vmatpush1.msra.mxu0 %v134
  %143 = vmatprep.subr.mxu0 0.0
  %144 = vmatpush1.msra.mxu0 %v135
  %145 = vmatprep.subr.mxu0 0.0
  %146 = vmatpush1.msra.mxu0 0.0
  %147 = vmatprep.subr.mxu0 0.0
  %148 = vmatpush1.msra.mxu0 0.0
  %149 = vmatprep.subr.mxu0 0.0
  %150 = vmatpush1.msra.mxu0 0.0
  %151 = vmatprep.subr.mxu0 0.0
  %152 = vmatpush1.msra.mxu0 0.0
  %153 = vmatprep.subr.mxu0 0.0
  %154 = vmatpush1.msra.mxu0 0.0
  %155 = vmatprep.subr.mxu0 0.0
  %156 = vmatpush1.msra.mxu0 0.0
  %157 = vmatprep.subr.mxu0 0.0
  %158 = vmatpush1.msra.mxu0 0.0
  %159 = vmatprep.subr.mxu0 0.0
  %160 = vmatpush1.msra.mxu0 0.0
  %161 = vmatprep.subr.mxu0 0.0
  %162 = vmatpush1.msra.mxu0 0.0
  %163 = vmatprep.subr.mxu0 0.0
  %164 = vmatpush1.msra.mxu0 0.0
  %165 = vmatprep.subr.mxu0 0.0
  %166 = vmatpush1.msra.mxu0 0.0
  %167 = vmatprep.subr.mxu0 0.0
  %168 = vmatpush1.msra.mxu0 0.0
  %169 = vmatprep.subr.mxu0 0.0
  %170 = vmatpush1.msra.mxu0 0.0
  %171 = vmatprep.subr.mxu0 0.0
  %172 = vmatpush1.msra.mxu0 0.0
  %173 = vmatprep.subr.mxu0 0.0
  %174 = vmatpush1.msra.mxu0 0.0
  %175 = vmatprep.subr.mxu0 0.0
  %176 = vmatpush1.msra.mxu0 0.0
  %177 = vmatprep.subr.mxu0 0.0
  %178 = vmatpush1.msra.mxu0 0.0
  %179 = vmatprep.subr.mxu0 0.0
  %180 = vmatpush1.msra.mxu0 0.0
  %181 = vmatprep.subr.mxu0 0.0
  %182 = vmatpush1.msra.mxu0 0.0
  %183 = vmatprep.subr.mxu0 0.0
  %184 = vmatpush1.msra.mxu0 0.0
  %185 = vmatprep.subr.mxu0 0.0
  %186 = vmatpush1.msra.mxu0 0.0
  %187 = vmatprep.subr.mxu0 0.0
  %188 = vmatpush1.msra.mxu0 0.0
  %189 = vmatprep.subr.mxu0 0.0
  %190 = vmatpush1.msra.mxu0 0.0
  %191 = vmatprep.subr.mxu0 0.0
  %192 = vmatpush1.msra.mxu0 0.0
  %193 = vmatprep.subr.mxu0 0.0
  %194 = vmatpush1.msra.mxu0 0.0
  %195 = vmatprep.subr.mxu0 0.0
  %196 = vmatpush1.msra.mxu0 0.0
  %197 = vmatprep.subr.mxu0 0.0
  %198 = vmatpush1.msra.mxu0 0.0
  %199 = vmatprep.subr.mxu0 0.0
  %200 = vmatpush1.msra.mxu0 0.0
  %201 = vmatprep.subr.mxu0 0.0
  %202 = vmatpush1.msra.mxu0 0.0
  %203 = vmatprep.subr.mxu0 0.0
  %204 = vmatpush1.msra.mxu0 0.0
  %205 = vmatprep.mubr.f32.mxu0 0.0
  %206 = vmatmul.mubr.f32.gmra.mrb[0].mxu0 %v139
  %v207 = vpop.f32.mrb[0].mxu0
  %v208 = vadd.f32 0.0, %v207
  %v209 = vpop.f32.mrb[0].mxu0
  %210 = vdwg.mxu0
  %v211 = vld [vmem:[%s4] sm:$0xff]
  %v212 = vld [vmem:[%s4 + $0x8] sm:$0xff]
  %v213 = vld [vmem:[%s4 + $0x10] sm:$0xff]
  %v214 = vld [vmem:[%s4 + $0x18] sm:$0xff]
  %v215 = vld [vmem:[%s4 + $0x20] sm:$0xff]
  %v216 = vld [vmem:[%s4 + $0x28] sm:$0xff]
  %v217 = vld [vmem:[%s4 + $0x30] sm:$0xff]
  %v218 = vld [vmem:[%s4 + $0x38] sm:$0xff]
  %v219 = vld [vmem:[%s5] sm:$0x1]
  %v221 = vlaneseq
  %v222 = vshrl.u32 %v221, 7
  %v223 = vsub.s32 0, %v222
  %v224 = vrot.slane %v219, %v223
  %v227 = vsel %vm52, %v208, 0
  %229 = vmatprep.subr.mxu0 0.0
  %230 = vmatpush1.msra.mxu0 %v211
  %231 = vmatprep.subr.mxu0 0.0
  %232 = vmatpush1.msra.mxu0 %v212
  %233 = vmatprep.subr.mxu0 0.0
  %234 = vmatpush1.msra.mxu0 %v213
  %235 = vmatprep.subr.mxu0 0.0
  %236 = vmatpush1.msra.mxu0 %v214
  %237 = vmatprep.subr.mxu0 0.0
  %238 = vmatpush1.msra.mxu0 %v215
  %239 = vmatprep.subr.mxu0 0.0
  %240 = vmatpush1.msra.mxu0 %v216
  %241 = vmatprep.subr.mxu0 0.0
  %242 = vmatpush1.msra.mxu0 %v217
  %243 = vmatprep.subr.mxu0 0.0
  %244 = vmatpush1.msra.mxu0 %v218
  %245 = vmatprep.subr.mxu0 0.0
  %246 = vmatpush1.msra.mxu0 0.0
  %247 = vmatprep.subr.mxu0 0.0
  %248 = vmatpush1.msra.mxu0 0.0
  %249 = vmatprep.subr.mxu0 0.0
  %250 = vmatpush1.msra.mxu0 0.0
  %251 = vmatprep.subr.mxu0 0.0
  %252 = vmatpush1.msra.mxu0 0.0
  %253 = vmatprep.subr.mxu0 0.0
  %254 = vmatpush1.msra.mxu0 0.0
  %255 = vmatprep.subr.mxu0 0.0
  %256 = vmatpush1.msra.mxu0 0.0
  %257 = vmatprep.subr.mxu0 0.0
  %258 = vmatpush1.msra.mxu0 0.0
  %259 = vmatprep.subr.mxu0 0.0
  %260 = vmatpush1.msra.mxu0 0.0
  %261 = vmatprep.subr.mxu0 0.0
  %262 = vmatpush1.msra.mxu0 0.0
  %263 = vmatprep.subr.mxu0 0.0
  %264 = vmatpush1.msra.mxu0 0.0
  %265 = vmatprep.subr.mxu0 0.0
  %266 = vmatpush1.msra.mxu0 0.0
  %267 = vmatprep.subr.mxu0 0.0
  %268 = vmatpush1.msra.mxu0 0.0
  %269 = vmatprep.subr.mxu0 0.0
  %270 = vmatpush1.msra.mxu0 0.0
  %271 = vmatprep.subr.mxu0 0.0
  %272 = vmatpush1.msra.mxu0 0.0
  %273 = vmatprep.subr.mxu0 0.0
  %274 = vmatpush1.msra.mxu0 0.0
  %275 = vmatprep.subr.mxu0 0.0
  %276 = vmatpush1.msra.mxu0 0.0
  %277 = vmatprep.subr.mxu0 0.0
  %278 = vmatpush1.msra.mxu0 0.0
  %279 = vmatprep.subr.mxu0 0.0
  %280 = vmatpush1.msra.mxu0 0.0
  %281 = vmatprep.subr.mxu0 0.0
  %282 = vmatpush1.msra.mxu0 0.0
  %283 = vmatprep.subr.mxu0 0.0
  %284 = vmatpush1.msra.mxu0 0.0
  %285 = vmatprep.subr.mxu0 0.0
  %286 = vmatpush1.msra.mxu0 0.0
  %287 = vmatprep.subr.mxu0 0.0
  %288 = vmatpush1.msra.mxu0 0.0
  %289 = vmatprep.subr.mxu0 0.0
  %290 = vmatpush1.msra.mxu0 0.0
  %291 = vmatprep.subr.mxu0 0.0
  %292 = vmatpush1.msra.mxu0 0.0
  %293 = vmatprep.mubr.f32.mxu0 0.0
  %294 = vmatmul.mubr.f32.gmra.mrb[0].mxu0 %v227
  %v295 = vpop.f32.mrb[0].mxu0
  %v296 = vadd.f32 %v224, %v295
  %v297 = vpop.f32.mrb[0].mxu0
  %298 = vdwg.mxu0
  %299 = vst.msk [vmem:[%s9] sm:$0xff] %vm52, %v296
  %v300 = vld [vmem:[%s6] sm:$0xff]
  %v301 = vld [vmem:[%s6 + $0x8] sm:$0xff]
  %v302 = vld [vmem:[%s6 + $0x10] sm:$0xff]
  %v303 = vld [vmem:[%s6 + $0x18] sm:$0xff]
  %v304 = vld [vmem:[%s6 + $0x20] sm:$0xff]
  %v305 = vld [vmem:[%s6 + $0x28] sm:$0xff]
  %v306 = vld [vmem:[%s6 + $0x30] sm:$0xff]
  %v307 = vld [vmem:[%s6 + $0x38] sm:$0xff]
  %v308 = vld [vmem:[%s6 + $0x40] sm:$0xff]
  %v309 = vld [vmem:[%s6 + $0x48] sm:$0xff]
  %v310 = vld [vmem:[%s6 + $0x50] sm:$0xff]
  %v311 = vld [vmem:[%s6 + $0x58] sm:$0xff]
  %v312 = vld [vmem:[%s6 + $0x60] sm:$0xff]
  %v313 = vld [vmem:[%s6 + $0x68] sm:$0xff]
  %v314 = vld [vmem:[%s6 + $0x70] sm:$0xff]
  %v315 = vld [vmem:[%s6 + $0x78] sm:$0xff]
  %v316 = vld [vmem:[%s8] sm:$0xff]
  %v317 = vld [vmem:[%s8 + $0x8] sm:$0xff]
  %v318 = vld [vmem:[%s8 + $0x10] sm:$0xff]
  %v319 = vld [vmem:[%s8 + $0x18] sm:$0xff]
  %v320 = vld [vmem:[%s8 + $0x20] sm:$0xff]
  %v321 = vld [vmem:[%s8 + $0x28] sm:$0xff]
  %v322 = vld [vmem:[%s8 + $0x30] sm:$0xff]
  %v323 = vld [vmem:[%s8 + $0x38] sm:$0xff]
  %v325 = vsel %vm52, %v300, 0
  %v328 = vsel %vm52, %v301, 0
  %v331 = vsel %vm52, %v302, 0
  %v334 = vsel %vm52, %v303, 0
  %v337 = vsel %vm52, %v304, 0
  %v340 = vsel %vm52, %v305, 0
  %v343 = vsel %vm52, %v306, 0
  %v346 = vsel %vm52, %v307, 0
  %v349 = vsel %vm52, %v308, 0
  %v352 = vsel %vm52, %v309, 0
  %v355 = vsel %vm52, %v310, 0
  %v358 = vsel %vm52, %v311, 0
  %v361 = vsel %vm52, %v312, 0
  %v364 = vsel %vm52, %v313, 0
  %v367 = vsel %vm52, %v314, 0
  %v370 = vsel %vm52, %v315, 0
  %372 = vmatprep.subr.mxu0 0.0
  %373 = vmatpush1.msra.mxu0 %v316
  %374 = vmatprep.subr.mxu0 0.0
  %375 = vmatpush1.msra.mxu0 %v317
  %376 = vmatprep.subr.mxu0 0.0
  %377 = vmatpush1.msra.mxu0 %v318
  %378 = vmatprep.subr.mxu0 0.0
  %379 = vmatpush1.msra.mxu0 %v319
  %380 = vmatprep.subr.mxu0 0.0
  %381 = vmatpush1.msra.mxu0 %v320
  %382 = vmatprep.subr.mxu0 0.0
  %383 = vmatpush1.msra.mxu0 %v321
  %384 = vmatprep.subr.mxu0 0.0
  %385 = vmatpush1.msra.mxu0 %v322
  %386 = vmatprep.subr.mxu0 0.0
  %387 = vmatpush1.msra.mxu0 %v323
  %388 = vmatprep.subr.mxu0 0.0
  %389 = vmatpush1.msra.mxu0 0.0
  %390 = vmatprep.subr.mxu0 0.0
  %391 = vmatpush1.msra.mxu0 0.0
  %392 = vmatprep.subr.mxu0 0.0
  %393 = vmatpush1.msra.mxu0 0.0
  %394 = vmatprep.subr.mxu0 0.0
  %395 = vmatpush1.msra.mxu0 0.0
  %396 = vmatprep.subr.mxu0 0.0
  %397 = vmatpush1.msra.mxu0 0.0
  %398 = vmatprep.subr.mxu0 0.0
  %399 = vmatpush1.msra.mxu0 0.0
  %400 = vmatprep.subr.mxu0 0.0
  %401 = vmatpush1.msra.mxu0 0.0
  %402 = vmatprep.subr.mxu0 0.0
  %403 = vmatpush1.msra.mxu0 0.0
  %404 = vmatprep.subr.mxu0 0.0
  %405 = vmatpush1.msra.mxu0 0.0
  %406 = vmatprep.subr.mxu0 0.0
  %407 = vmatpush1.msra.mxu0 0.0
  %408 = vmatprep.subr.mxu0 0.0
  %409 = vmatpush1.msra.mxu0 0.0
  %410 = vmatprep.subr.mxu0 0.0
  %411 = vmatpush1.msra.mxu0 0.0
  %412 = vmatprep.subr.mxu0 0.0
  %413 = vmatpush1.msra.mxu0 0.0
  %414 = vmatprep.subr.mxu0 0.0
  %415 = vmatpush1.msra.mxu0 0.0
  %416 = vmatprep.subr.mxu0 0.0
  %417 = vmatpush1.msra.mxu0 0.0
  %418 = vmatprep.subr.mxu0 0.0
  %419 = vmatpush1.msra.mxu0 0.0
  %420 = vmatprep.subr.mxu0 0.0
  %421 = vmatpush1.msra.mxu0 0.0
  %422 = vmatprep.subr.mxu0 0.0
  %423 = vmatpush1.msra.mxu0 0.0
  %424 = vmatprep.subr.mxu0 0.0
  %425 = vmatpush1.msra.mxu0 0.0
  %426 = vmatprep.subr.mxu0 0.0
  %427 = vmatpush1.msra.mxu0 0.0
  %428 = vmatprep.subr.mxu0 0.0
  %429 = vmatpush1.msra.mxu0 0.0
  %430 = vmatprep.subr.mxu0 0.0
  %431 = vmatpush1.msra.mxu0 0.0
  %432 = vmatprep.subr.mxu0 0.0
  %433 = vmatpush1.msra.mxu0 0.0
  %434 = vmatprep.subr.mxu0 0.0
  %435 = vmatpush1.msra.mxu0 0.0
  %436 = vmatprep.mubr.f32.mxu0 0.0
  %437 = vmatmul.mubr.f32.gmra.mrb[0].mxu0 %v325
  %v438 = vpop.f32.mrb[0].mxu0
  %v439 = vadd.f32 0.0, %v438
  %v440 = vpop.f32.mrb[0].mxu0
  %441 = vmatprep.mubr.f32.mxu0 0.0
  %442 = vmatmul.mubr.f32.gmra.mrb[0].mxu0 %v328
  %v443 = vpop.f32.mrb[0].mxu0
  %v444 = vadd.f32 0.0, %v443
  %v445 = vpop.f32.mrb[0].mxu0
  %446 = vmatprep.mubr.f32.mxu0 0.0
  %447 = vmatmul.mubr.f32.gmra.mrb[0].mxu0 %v331
  %v448 = vpop.f32.mrb[0].mxu0
  %v449 = vadd.f32 0.0, %v448
  %v450 = vpop.f32.mrb[0].mxu0
  %451 = vmatprep.mubr.f32.mxu0 0.0
  %452 = vmatmul.mubr.f32.gmra.mrb[0].mxu0 %v334
  %v453 = vpop.f32.mrb[0].mxu0
  %v454 = vadd.f32 0.0, %v453
  %v455 = vpop.f32.mrb[0].mxu0
  %456 = vmatprep.mubr.f32.mxu0 0.0
  %457 = vmatmul.mubr.f32.gmra.mrb[0].mxu0 %v337
  %v458 = vpop.f32.mrb[0].mxu0
  %v459 = vadd.f32 0.0, %v458
  %v460 = vpop.f32.mrb[0].mxu0
  %461 = vmatprep.mubr.f32.mxu0 0.0
  %462 = vmatmul.mubr.f32.gmra.mrb[0].mxu0 %v340
  %v463 = vpop.f32.mrb[0].mxu0
  %v464 = vadd.f32 0.0, %v463
  %v465 = vpop.f32.mrb[0].mxu0
  %466 = vmatprep.mubr.f32.mxu0 0.0
  %467 = vmatmul.mubr.f32.gmra.mrb[0].mxu0 %v343
  %v468 = vpop.f32.mrb[0].mxu0
  %v469 = vadd.f32 0.0, %v468
  %v470 = vpop.f32.mrb[0].mxu0
  %471 = vmatprep.mubr.f32.mxu0 0.0
  %472 = vmatmul.mubr.f32.gmra.mrb[0].mxu0 %v346
  %v473 = vpop.f32.mrb[0].mxu0
  %v474 = vadd.f32 0.0, %v473
  %v475 = vpop.f32.mrb[0].mxu0
  %476 = vmatprep.mubr.f32.mxu0 0.0
  %477 = vmatmul.mubr.f32.gmra.mrb[0].mxu0 %v349
  %v478 = vpop.f32.mrb[0].mxu0
  %v479 = vadd.f32 0.0, %v478
  %v480 = vpop.f32.mrb[0].mxu0
  %481 = vmatprep.mubr.f32.mxu0 0.0
  %482 = vmatmul.mubr.f32.gmra.mrb[0].mxu0 %v352
  %v483 = vpop.f32.mrb[0].mxu0
  %v484 = vadd.f32 0.0, %v483
  %v485 = vpop.f32.mrb[0].mxu0
  %486 = vmatprep.mubr.f32.mxu0 0.0
  %487 = vmatmul.mubr.f32.gmra.mrb[0].mxu0 %v355
  %v488 = vpop.f32.mrb[0].mxu0
  %v489 = vadd.f32 0.0, %v488
  %v490 = vpop.f32.mrb[0].mxu0
  %491 = vmatprep.mubr.f32.mxu0 0.0
  %492 = vmatmul.mubr.f32.gmra.mrb[0].mxu0 %v358
  %v493 = vpop.f32.mrb[0].mxu0
  %v494 = vadd.f32 0.0, %v493
  %v495 = vpop.f32.mrb[0].mxu0
  %496 = vmatprep.mubr.f32.mxu0 0.0
  %497 = vmatmul.mubr.f32.gmra.mrb[0].mxu0 %v361
  %v498 = vpop.f32.mrb[0].mxu0
  %v499 = vadd.f32 0.0, %v498
  %v500 = vpop.f32.mrb[0].mxu0
  %501 = vmatprep.mubr.f32.mxu0 0.0
  %502 = vmatmul.mubr.f32.gmra.mrb[0].mxu0 %v364
  %v503 = vpop.f32.mrb[0].mxu0
  %v504 = vadd.f32 0.0, %v503
  %v505 = vpop.f32.mrb[0].mxu0
  %506 = vmatprep.mubr.f32.mxu0 0.0
  %507 = vmatmul.mubr.f32.gmra.mrb[0].mxu0 %v367
  %v508 = vpop.f32.mrb[0].mxu0
  %v509 = vadd.f32 0.0, %v508
  %v510 = vpop.f32.mrb[0].mxu0
  %511 = vmatprep.mubr.f32.mxu0 0.0
  %512 = vmatmul.mubr.f32.gmra.mrb[0].mxu0 %v370
  %v513 = vpop.f32.mrb[0].mxu0
  %v514 = vadd.f32 0.0, %v513
  %v515 = vpop.f32.mrb[0].mxu0
  %516 = vdwg.mxu0
  %517 = vst.msk [vmem:[%s10] sm:$0xff] %vm52, %v439
  %518 = vst.msk [vmem:[%s10 + $0x8] sm:$0xff] %vm52, %v444
  %519 = vst.msk [vmem:[%s10 + $0x10] sm:$0xff] %vm52, %v449
  %520 = vst.msk [vmem:[%s10 + $0x18] sm:$0xff] %vm52, %v454
  %521 = vst.msk [vmem:[%s10 + $0x20] sm:$0xff] %vm52, %v459
  %522 = vst.msk [vmem:[%s10 + $0x28] sm:$0xff] %vm52, %v464
  %523 = vst.msk [vmem:[%s10 + $0x30] sm:$0xff] %vm52, %v469
  %524 = vst.msk [vmem:[%s10 + $0x38] sm:$0xff] %vm52, %v474
  %525 = vst.msk [vmem:[%s10 + $0x40] sm:$0xff] %vm52, %v479
  %526 = vst.msk [vmem:[%s10 + $0x48] sm:$0xff] %vm52, %v484
  %527 = vst.msk [vmem:[%s10 + $0x50] sm:$0xff] %vm52, %v489
  %528 = vst.msk [vmem:[%s10 + $0x58] sm:$0xff] %vm52, %v494
  %529 = vst.msk [vmem:[%s10 + $0x60] sm:$0xff] %vm52, %v499
  %530 = vst.msk [vmem:[%s10 + $0x68] sm:$0xff] %vm52, %v504
  %531 = vst.msk [vmem:[%s10 + $0x70] sm:$0xff] %vm52, %v509
  %532 = vst.msk [vmem:[%s10 + $0x78] sm:$0xff] %vm52, %v514
  %v533 = vld [vmem:[%s7] sm:$0xff]
  %v534 = vld [vmem:[%s7 + $0x8] sm:$0xff]
  %v535 = vld [vmem:[%s7 + $0x10] sm:$0xff]
  %v536 = vld [vmem:[%s7 + $0x18] sm:$0xff]
  %v537 = vld [vmem:[%s8] sm:$0xff]
  %v538 = vld [vmem:[%s8 + $0x8] sm:$0xff]
  %v539 = vld [vmem:[%s8 + $0x10] sm:$0xff]
  %v540 = vld [vmem:[%s8 + $0x18] sm:$0xff]
  %v541 = vld [vmem:[%s8 + $0x20] sm:$0xff]
  %v542 = vld [vmem:[%s8 + $0x28] sm:$0xff]
  %v543 = vld [vmem:[%s8 + $0x30] sm:$0xff]
  %v544 = vld [vmem:[%s8 + $0x38] sm:$0xff]
  %v546 = vsel %vm52, %v533, 0
  %v549 = vsel %vm52, %v534, 0
  %v552 = vsel %vm52, %v535, 0
  %v555 = vsel %vm52, %v536, 0
  %557 = vmatprep.subr.mxu0 0.0
  %558 = vmatpush1.msra.mxu0 %v537
  %559 = vmatprep.subr.mxu0 0.0
  %560 = vmatpush1.msra.mxu0 %v538
  %561 = vmatprep.subr.mxu0 0.0
  %562 = vmatpush1.msra.mxu0 %v539
  %563 = vmatprep.subr.mxu0 0.0
  %564 = vmatpush1.msra.mxu0 %v540
  %565 = vmatprep.subr.mxu0 0.0
  %566 = vmatpush1.msra.mxu0 %v541
  %567 = vmatprep.subr.mxu0 0.0
  %568 = vmatpush1.msra.mxu0 %v542
  %569 = vmatprep.subr.mxu0 0.0
  %570 = vmatpush1.msra.mxu0 %v543
  %571 = vmatprep.subr.mxu0 0.0
  %572 = vmatpush1.msra.mxu0 %v544
  %573 = vmatprep.subr.mxu0 0.0
  %574 = vmatpush1.msra.mxu0 0.0
  %575 = vmatprep.subr.mxu0 0.0
  %576 = vmatpush1.msra.mxu0 0.0
  %577 = vmatprep.subr.mxu0 0.0
  %578 = vmatpush1.msra.mxu0 0.0
  %579 = vmatprep.subr.mxu0 0.0
  %580 = vmatpush1.msra.mxu0 0.0
  %581 = vmatprep.subr.mxu0 0.0
  %582 = vmatpush1.msra.mxu0 0.0
  %583 = vmatprep.subr.mxu0 0.0
  %584 = vmatpush1.msra.mxu0 0.0
  %585 = vmatprep.subr.mxu0 0.0
  %586 = vmatpush1.msra.mxu0 0.0
  %587 = vmatprep.subr.mxu0 0.0
  %588 = vmatpush1.msra.mxu0 0.0
  %589 = vmatprep.subr.mxu0 0.0
  %590 = vmatpush1.msra.mxu0 0.0
  %591 = vmatprep.subr.mxu0 0.0
  %592 = vmatpush1.msra.mxu0 0.0
  %593 = vmatprep.subr.mxu0 0.0
  %594 = vmatpush1.msra.mxu0 0.0
  %595 = vmatprep.subr.mxu0 0.0
  %596 = vmatpush1.msra.mxu0 0.0
  %597 = vmatprep.subr.mxu0 0.0
  %598 = vmatpush1.msra.mxu0 0.0
  %599 = vmatprep.subr.mxu0 0.0
  %600 = vmatpush1.msra.mxu0 0.0
  %601 = vmatprep.subr.mxu0 0.0
  %602 = vmatpush1.msra.mxu0 0.0
  %603 = vmatprep.subr.mxu0 0.0
  %604 = vmatpush1.msra.mxu0 0.0
  %605 = vmatprep.subr.mxu0 0.0
  %606 = vmatpush1.msra.mxu0 0.0
  %607 = vmatprep.subr.mxu0 0.0
  %608 = vmatpush1.msra.mxu0 0.0
  %609 = vmatprep.subr.mxu0 0.0
  %610 = vmatpush1.msra.mxu0 0.0
  %611 = vmatprep.subr.mxu0 0.0
  %612 = vmatpush1.msra.mxu0 0.0
  %613 = vmatprep.subr.mxu0 0.0
  %614 = vmatpush1.msra.mxu0 0.0
  %615 = vmatprep.subr.mxu0 0.0
  %616 = vmatpush1.msra.mxu0 0.0
  %617 = vmatprep.subr.mxu0 0.0
  %618 = vmatpush1.msra.mxu0 0.0
  %619 = vmatprep.subr.mxu0 0.0
  %620 = vmatpush1.msra.mxu0 0.0
  %621 = vmatprep.mubr.f32.mxu0 0.0
  %622 = vmatmul.mubr.f32.gmra.mrb[0].mxu0 %v546
  %v623 = vpop.f32.mrb[0].mxu0
  %v624 = vadd.f32 0.0, %v623
  %v625 = vpop.f32.mrb[0].mxu0
  %626 = vmatprep.mubr.f32.mxu0 0.0
  %627 = vmatmul.mubr.f32.gmra.mrb[0].mxu0 %v549
  %v628 = vpop.f32.mrb[0].mxu0
  %v629 = vadd.f32 0.0, %v628
  %v630 = vpop.f32.mrb[0].mxu0
  %631 = vmatprep.mubr.f32.mxu0 0.0
  %632 = vmatmul.mubr.f32.gmra.mrb[0].mxu0 %v552
  %v633 = vpop.f32.mrb[0].mxu0
  %v634 = vadd.f32 0.0, %v633
  %v635 = vpop.f32.mrb[0].mxu0
  %636 = vmatprep.mubr.f32.mxu0 0.0
  %637 = vmatmul.mubr.f32.gmra.mrb[0].mxu0 %v555
  %v638 = vpop.f32.mrb[0].mxu0
  %v639 = vadd.f32 0.0, %v638
  %v640 = vpop.f32.mrb[0].mxu0
  %641 = vdwg.mxu0
  %642 = vst.msk [vmem:[%s11] sm:$0xff] %vm52, %v624
  %643 = vst.msk [vmem:[%s11 + $0x8] sm:$0xff] %vm52, %v629
  %644 = vst.msk [vmem:[%s11 + $0x10] sm:$0xff] %vm52, %v634
  %645 = vst.msk [vmem:[%s11 + $0x18] sm:$0xff] %vm52, %v639
  // Predicated region
  $region38: #{run.2} parent=0 // pred_check
    _
  $region39: #{run.2} parent=0 // pred_check_branch
    %647 = sbr.rel (0) target = $region41
  $region40: #{run.2} parent=0 // pred_region
    _
  $region41: #{run.2} parent=0 // pred_fallthru
    _
  // Predicated region
  $region42: #{run.2} parent=0 // pred_check
    _
  $region43: #{run.2} parent=0 // pred_check_branch
    %649 = sbr.rel (0) target = $region45
  $region44: #{run.2} parent=0 // pred_region
    _
  $region45: #{run.2} parent=0 // pred_fallthru
    _
  // Predicated region
  $region46: #{run.2} parent=0 // pred_check
    _
  $region47: #{run.2} parent=0 // pred_check_branch
    %651 = sbr.rel (0) target = $region49
  $region48: #{run.2} parent=0 // pred_region
    _
  $region49: #{run.2} parent=0 // pred_fallthru
    _
  // Predicated region
  $region50: #{run.2} parent=0 // pred_check
    _
  $region51: #{run.2} parent=0 // pred_check_branch
    %653 = sbr.rel (0) target = $region53
  $region52: #{run.2} parent=0 // pred_region
    _
  $region53: #{run.2} parent=0 // pred_fallthru
    _
  // Predicated region
  $region54: #{run.2} parent=0 // pred_check
    _
  $region55: #{run.2} parent=0 // pred_check_branch
    %655 = sbr.rel (0) target = $region57
  $region56: #{run.2} parent=0 // pred_region
    _
  $region57: #{run.2} parent=0 // pred_fallthru
    _
  // Predicated region
  $region58: #{run.2} parent=0 // pred_check
    _
  $region59: #{run.2} parent=0 // pred_check_branch
    %657 = sbr.rel (0) target = $region61
  $region60: #{run.2} parent=0 // pred_region
    _
  $region61: #{run.2} parent=0 // pred_fallthru
    _

// kernel: run.3
$region0: #{run.3}
  #allocation0 [shape = 'u32[]', space=smem, size = 0x4, offset = 0x4, fixed_abs, tag = 'smem constant byte address 0x4 - core index']
  #allocation1 [shape = 'u32[144,128]{1,0:T(1,128)}', space=vmem, size = 0x12000, scoped, tag = 'internal scratch']
  #allocation2 [shape = 'f32[8,1]{1,0:T(8,128)}', space=vmem, size = 0x1000, scoped, tag = 'scratch operand']
  #allocation3 [shape = 'f32[8,1]{1,0:T(8,128)}', space=vmem, size = 0x1000, scoped, tag = 'scratch operand']
  #allocation4 [shape = 'f32[8,1]{1,0:T(8,128)}', space=vmem, size = 0x1000, scoped, tag = 'scratch operand']
  #allocation5 [shape = 's32[8,1]{1,0:T(8,128)}', space=vmem, size = 0x1000, scoped, tag = 'scratch operand']
  %s0 = inlined_call_operand.vmem [shape: f32[8,64], index: 0, kind: input, shape index: {}]
  %s1 = inlined_call_operand.vmem [shape: f32[128,64], index: 1, kind: input, shape index: {}]
  %s2 = inlined_call_operand.vmem [shape: f32[32,64], index: 2, kind: input, shape index: {}]
  %s3 = inlined_call_operand.vmem [shape: f32[64,128], index: 3, kind: input, shape index: {}]
  %s4 = inlined_call_operand.vmem [shape: f32[1,128], index: 4, kind: input, shape index: {}]
  %s5 = inlined_call_operand.vmem [shape: s32[8,1], index: 5, kind: input, shape index: {}]
  %s6 = inlined_call_operand.vmem [shape: s32[8,1], index: 6, kind: input, shape index: {}]
  %s7 = inlined_call_operand.hbm [shape: s32[8,128], index: 7, kind: output, shape index: {0}]
  %s8 = inlined_call_operand.hbm [shape: s32[8,128], index: 8, kind: output, shape index: {1}]
  %s9 = inlined_call_operand.hbm [shape: s32[1,1], index: 9, kind: output, shape index: {2}]
  %10 = xla_tuple %s7, %s8, %s9
  %s11 = sld [smem:[#allocation0]]
  $region61: #{run.3} parent=0
    _
  %s13 = ssub.s32 1, %s11
  %s14 = scalar_select 0, %s13, %s11
  $region1: #{run.3} parent=0
    #allocation6 [shape = 'u8[4096]{0}', space=vmem, size = 0x1000, scoped, tag = 'output window, operand 0, single buffered']
    #allocation7 [shape = 's32[1]{0}', space=sflag, size = 0x4, scoped, tag = 'scoped memory for run.3']
    #allocation8 [shape = 'u8[4096]{0}', space=vmem, size = 0x1000, scoped, tag = 'output window, operand 1, single buffered']
    #allocation9 [shape = 's32[1]{0}', space=sflag, size = 0x4, scoped, tag = 'scoped memory for run.3']
    #allocation10 [shape = 'u8[512]{0}', space=vmem, size = 0x400, scoped, tag = 'output window, operand 2, single buffered']
    %15 = vsyncpa [#allocation7], 0
    %16 = vsyncpa [#allocation9], 0
    // Predicated region
    $region2: #{run.3} parent=1 // pred_check
      _
    $region3: #{run.3} parent=1 // pred_check_branch
      %18 = sbr.rel (0) target = $region5
    $region4: #{run.3} parent=1 // pred_region
      _
    $region5: #{run.3} parent=1 // pred_fallthru
      _
    // Predicated region
    $region6: #{run.3} parent=1 // pred_check
      _
    $region7: #{run.3} parent=1 // pred_check_branch
      %20 = sbr.rel (0) target = $region9
    $region8: #{run.3} parent=1 // pred_region
      _
    $region9: #{run.3} parent=1 // pred_fallthru
      _
    // Predicated region
    $region10: #{run.3} parent=1 // pred_check
      _
    $region11: #{run.3} parent=1 // pred_check_branch
      %22 = sbr.rel (0) target = $region13
    $region12: #{run.3} parent=1 // pred_region
      _
    $region13: #{run.3} parent=1 // pred_fallthru
      _
    // Predicated region
    $region14: #{run.3} parent=1 // pred_check
      _
    $region15: #{run.3} parent=1 // pred_check_branch
      %24 = sbr.rel (0) target = $region17
    $region16: #{run.3} parent=1 // pred_region
      _
    $region17: #{run.3} parent=1 // pred_fallthru
      _
    // Predicated region
    $region18: #{run.3} parent=1 // pred_check
      _
    $region19: #{run.3} parent=1 // pred_check_branch
      %26 = sbr.rel (0) target = $region21
    $region20: #{run.3} parent=1 // pred_region
      _
    $region21: #{run.3} parent=1 // pred_fallthru
      _
    // Predicated region
    $region22: #{run.3} parent=1 // pred_check
      _
    $region23: #{run.3} parent=1 // pred_check_branch
      %28 = sbr.rel (0) target = $region25
    $region24: #{run.3} parent=1 // pred_region
      _
    $region25: #{run.3} parent=1 // pred_fallthru
      _
    // Predicated region
    $region26: #{run.3} parent=1 // pred_check
      _
    $region27: #{run.3} parent=1 // pred_check_branch
      %30 = sbr.rel (0) target = $region29
    $region28: #{run.3} parent=1 // pred_region
      _
    $region29: #{run.3} parent=1 // pred_fallthru
      _
    %v31 = vlaneseq
    %v32 = vshrl.u32 %v31, 7
    %v33 = vlaneseq
    %v34 = vand.u32 %v33, 127
    %vm35 = vcmp.eq.s32.totalorder %v34, %v32
    %vm36 = vcmp.lt.s32.totalorder %v32, 6
    %vm37 = vcmp.eq.s32.totalorder %v32, 1
    %v38 = vsel %vm37, 1, 0
    %vm39 = vcmp.eq.s32.totalorder %v32, 2
    %v40 = vsel %vm39, 2, %v38
    %vm41 = vcmp.eq.s32.totalorder %v32, 3
    %v42 = vsel %vm41, 3, 0
    %v43 = vsel %vm41, 0, %v40
    %vm44 = vcmp.eq.s32.totalorder %v32, 4
    %v45 = vsel %vm44, 3, %v42
    %v46 = vsel %vm44, 1, %v43
    %vm47 = vcmp.eq.s32.totalorder %v32, 5
    %v48 = vsel %vm47, 3, %v45
    %v49 = vsel %vm47, 2, %v46
    %v50 = vmul.u32 %v49, 128
    %v51 = vadd.s32 %v50, %v34
    %vm52 = vcmp.eq.s32.totalorder %v48, 0
    %vm53 = vcmp.eq.s32.totalorder %v48, 3
    %vm54 = vcmp.eq.s32.totalorder %v49, 0
    %vm55 = vmand %vm54, %vm36
    %vm56 = vcmp.eq.s32.totalorder %v49, 1
    %vm57 = vmand %vm56, %vm36
    %vm58 = vcmp.eq.s32.totalorder %v49, 2
    %vm59 = vmand %vm58, %vm36
    %v60 = vld [vmem:[%s0] sm:$0xff]
    %v61 = vld [vmem:[%s4] sm:$0x1]
    %v62 = vld [vmem:[%s6] sm:$0xff]
    %v63 = vld [vmem:[%s5] sm:$0xff]
    %vm64 = vcmask 7168
    %65 = vst.msk [vmem:[#allocation5] sm:$0xff] %vm64, %v63
    %vm66 = vcmp.eq.s32.totalorder %v63, 2
    %v67 = vsel %vm66, 1, 0
    %v68 = vcvt.s32.f32 %v67
    %v69 = vsel %vm36, %v68, 0.0
    %70 = vst.msk [vmem:[#allocation4] sm:$0xff] %vm64, %v69
    %71 = vst.msk [vmem:[#allocation2] sm:$0xff] %vm64, 0.0
    %72 = vst.msk [vmem:[#allocation3] sm:$0xff] %vm64, 0.0
    %73 = vst [vmem:[#allocation6] sm:$0xff] 0
    %74 = vst [vmem:[#allocation8] sm:$0xff] 0
    %vm75 = vcmask 0
    %76 = vst.msk [vmem:[#allocation10] sm:$0x1] %vm75, 1
    loop: start=0, step=1, limit=12
    $region30: #{run.3} parent=1 // loop_pre_header
      _
    $region31: #{run.3} parent=1 // loop_header
      %s78 = sphi 0, %s82
      %p79 = scmp.ge.s32.totalorder %s78, 12
    $region32: #{run.3} parent=1 // loop_header_branch
      %81 = sbr.rel (%p79) target = $region36
    $region33: #{run.3} parent=1 // loop_body
      %v83 = vld [vmem:[#allocation2] sm:$0xff]
      %v84 = vld [vmem:[#allocation3] sm:$0xff]
      %v85 = vld [vmem:[#allocation4] sm:$0xff]
      %v86 = vld [vmem:[#allocation5] sm:$0xff]
      %v87 = vsel %vm64, %v85, 0.0
      %v88 = vrot.slane %v87, 4
      %v89 = vadd.f32 %v87, %v88
      %v90 = vrot.slane %v89, 2
      %v91 = vadd.f32 %v89, %v90
      %v92 = vrot.slane %v91, 1
      %v93 = vadd.f32 %v91, %v92
      %vm94 = vcmp.ge.f32.partialorder %v93, 5.5
      %p95 = scmp.ge.s32.totalorder %s78, 1
      %s96 = scalar_select %p95, 1, 0
      %v97 = vstv %s96
      %vm98 = vcmp.eq.s32.totalorder %v97, 1
      %vm99 = vmand %vm94, %vm98
      %100 = vset.pattern.permute.xlu0 0
      %101 = vperm.xlu0 %100, %v86
      %v102 = vpop.permute.xlu0 %101
      %vm103 = vcmp.eq.s32.totalorder %v102, %v34
      %v104 = vsel %vm103, 1, 0
      %v105 = vcvt.s32.f32 %v104
      %v106 = vld [vmem:[%s1] sm:$0xff]
      %v107 = vld [vmem:[%s1 + $0x8] sm:$0xff]
      %v108 = vld [vmem:[%s1 + $0x10] sm:$0xff]
      %v109 = vld [vmem:[%s1 + $0x18] sm:$0xff]
      %v110 = vld [vmem:[%s1 + $0x20] sm:$0xff]
      %v111 = vld [vmem:[%s1 + $0x28] sm:$0xff]
      %v112 = vld [vmem:[%s1 + $0x30] sm:$0xff]
      %v113 = vld [vmem:[%s1 + $0x38] sm:$0xff]
      %v114 = vld [vmem:[%s1 + $0x40] sm:$0xff]
      %v115 = vld [vmem:[%s1 + $0x48] sm:$0xff]
      %v116 = vld [vmem:[%s1 + $0x50] sm:$0xff]
      %v117 = vld [vmem:[%s1 + $0x58] sm:$0xff]
      %v118 = vld [vmem:[%s1 + $0x60] sm:$0xff]
      %v119 = vld [vmem:[%s1 + $0x68] sm:$0xff]
      %v120 = vld [vmem:[%s1 + $0x70] sm:$0xff]
      %v121 = vld [vmem:[%s1 + $0x78] sm:$0xff]
      %s122 = scalar_lea.vmem %s2, %s78
      %v123 = vld [vmem:[%s122] sm:$0x1]
      %v124 = vlaneseq
      %v125 = vshrl.u32 %v124, 7
      %v126 = vsub.s32 0, %v125
      %v127 = vrot.slane %v123, %v126
      %128 = vmatprep.subr.mxu0 0.0
      %129 = vmatpush1.msra.mxu0 %v106
      %130 = vmatprep.subr.mxu0 0.0
      %131 = vmatpush1.msra.mxu0 %v107
      %132 = vmatprep.subr.mxu0 0.0
      %133 = vmatpush1.msra.mxu0 %v108
      %134 = vmatprep.subr.mxu0 0.0
      %135 = vmatpush1.msra.mxu0 %v109
      %136 = vmatprep.subr.mxu0 0.0
      %137 = vmatpush1.msra.mxu0 %v110
      %138 = vmatprep.subr.mxu0 0.0
      %139 = vmatpush1.msra.mxu0 %v111
      %140 = vmatprep.subr.mxu0 0.0
      %141 = vmatpush1.msra.mxu0 %v112
      %142 = vmatprep.subr.mxu0 0.0
      %143 = vmatpush1.msra.mxu0 %v113
      %144 = vmatprep.subr.mxu0 0.0
      %145 = vmatpush1.msra.mxu0 %v114
      %146 = vmatprep.subr.mxu0 0.0
      %147 = vmatpush1.msra.mxu0 %v115
      %148 = vmatprep.subr.mxu0 0.0
      %149 = vmatpush1.msra.mxu0 %v116
      %150 = vmatprep.subr.mxu0 0.0
      %151 = vmatpush1.msra.mxu0 %v117
      %152 = vmatprep.subr.mxu0 0.0
      %153 = vmatpush1.msra.mxu0 %v118
      %154 = vmatprep.subr.mxu0 0.0
      %155 = vmatpush1.msra.mxu0 %v119
      %156 = vmatprep.subr.mxu0 0.0
      %157 = vmatpush1.msra.mxu0 %v120
      %158 = vmatprep.subr.mxu0 0.0
      %159 = vmatpush1.msra.mxu0 %v121
      %160 = vmatprep.subr.mxu0 0.0
      %161 = vmatpush1.msra.mxu0 0.0
      %162 = vmatprep.subr.mxu0 0.0
      %163 = vmatpush1.msra.mxu0 0.0
      %164 = vmatprep.subr.mxu0 0.0
      %165 = vmatpush1.msra.mxu0 0.0
      %166 = vmatprep.subr.mxu0 0.0
      %167 = vmatpush1.msra.mxu0 0.0
      %168 = vmatprep.subr.mxu0 0.0
      %169 = vmatpush1.msra.mxu0 0.0
      %170 = vmatprep.subr.mxu0 0.0
      %171 = vmatpush1.msra.mxu0 0.0
      %172 = vmatprep.subr.mxu0 0.0
      %173 = vmatpush1.msra.mxu0 0.0
      %174 = vmatprep.subr.mxu0 0.0
      %175 = vmatpush1.msra.mxu0 0.0
      %176 = vmatprep.subr.mxu0 0.0
      %177 = vmatpush1.msra.mxu0 0.0
      %178 = vmatprep.subr.mxu0 0.0
      %179 = vmatpush1.msra.mxu0 0.0
      %180 = vmatprep.subr.mxu0 0.0
      %181 = vmatpush1.msra.mxu0 0.0
      %182 = vmatprep.subr.mxu0 0.0
      %183 = vmatpush1.msra.mxu0 0.0
      %184 = vmatprep.subr.mxu0 0.0
      %185 = vmatpush1.msra.mxu0 0.0
      %186 = vmatprep.subr.mxu0 0.0
      %187 = vmatpush1.msra.mxu0 0.0
      %188 = vmatprep.subr.mxu0 0.0
      %189 = vmatpush1.msra.mxu0 0.0
      %190 = vmatprep.subr.mxu0 0.0
      %191 = vmatpush1.msra.mxu0 0.0
      %192 = vmatprep.mubr.f32.mxu0 0.0
      %193 = vmatmul.mubr.f32.gmra.mrb[0].mxu0 %v105
      %v194 = vpop.f32.mrb[0].mxu0
      %v195 = vadd.f32 %v127, %v194
      %v196 = vpop.f32.mrb[0].mxu0
      %197 = vdwg.mxu0
      %v198 = vadd.f32 %v195, %v60
      %v199 = vtanh.pop %v198
      %v200 = vld [vmem:[%s3] sm:$0xff]
      %v201 = vld [vmem:[%s3 + $0x8] sm:$0xff]
      %v202 = vld [vmem:[%s3 + $0x10] sm:$0xff]
      %v203 = vld [vmem:[%s3 + $0x18] sm:$0xff]
      %v204 = vld [vmem:[%s3 + $0x20] sm:$0xff]
      %v205 = vld [vmem:[%s3 + $0x28] sm:$0xff]
      %v206 = vld [vmem:[%s3 + $0x30] sm:$0xff]
      %v207 = vld [vmem:[%s3 + $0x38] sm:$0xff]
      %v209 = vlaneseq
      %v210 = vshrl.u32 %v209, 7
      %v211 = vsub.s32 0, %v210
      %v212 = vrot.slane %v61, %v211
      %vm214 = vcmask 523264
      %v216 = vsel %vm214, %v199, 0
      %218 = vmatprep.subr.mxu0 0.0
      %219 = vmatpush1.msra.mxu0 %v200
      %220 = vmatprep.subr.mxu0 0.0
      %221 = vmatpush1.msra.mxu0 %v201
      %222 = vmatprep.subr.mxu0 0.0
      %223 = vmatpush1.msra.mxu0 %v202
      %224 = vmatprep.subr.mxu0 0.0
      %225 = vmatpush1.msra.mxu0 %v203
      %226 = vmatprep.subr.mxu0 0.0
      %227 = vmatpush1.msra.mxu0 %v204
      %228 = vmatprep.subr.mxu0 0.0
      %229 = vmatpush1.msra.mxu0 %v205
      %230 = vmatprep.subr.mxu0 0.0
      %231 = vmatpush1.msra.mxu0 %v206
      %232 = vmatprep.subr.mxu0 0.0
      %233 = vmatpush1.msra.mxu0 %v207
      %234 = vmatprep.subr.mxu0 0.0
      %235 = vmatpush1.msra.mxu0 0.0
      %236 = vmatprep.subr.mxu0 0.0
      %237 = vmatpush1.msra.mxu0 0.0
      %238 = vmatprep.subr.mxu0 0.0
      %239 = vmatpush1.msra.mxu0 0.0
      %240 = vmatprep.subr.mxu0 0.0
      %241 = vmatpush1.msra.mxu0 0.0
      %242 = vmatprep.subr.mxu0 0.0
      %243 = vmatpush1.msra.mxu0 0.0
      %244 = vmatprep.subr.mxu0 0.0
      %245 = vmatpush1.msra.mxu0 0.0
      %246 = vmatprep.subr.mxu0 0.0
      %247 = vmatpush1.msra.mxu0 0.0
      %248 = vmatprep.subr.mxu0 0.0
      %249 = vmatpush1.msra.mxu0 0.0
      %250 = vmatprep.subr.mxu0 0.0
      %251 = vmatpush1.msra.mxu0 0.0
      %252 = vmatprep.subr.mxu0 0.0
      %253 = vmatpush1.msra.mxu0 0.0
      %254 = vmatprep.subr.mxu0 0.0
      %255 = vmatpush1.msra.mxu0 0.0
      %256 = vmatprep.subr.mxu0 0.0
      %257 = vmatpush1.msra.mxu0 0.0
      %258 = vmatprep.subr.mxu0 0.0
      %259 = vmatpush1.msra.mxu0 0.0
      %260 = vmatprep.subr.mxu0 0.0
      %261 = vmatpush1.msra.mxu0 0.0
      %262 = vmatprep.subr.mxu0 0.0
      %263 = vmatpush1.msra.mxu0 0.0
      %264 = vmatprep.subr.mxu0 0.0
      %265 = vmatpush1.msra.mxu0 0.0
      %266 = vmatprep.subr.mxu0 0.0
      %267 = vmatpush1.msra.mxu0 0.0
      %268 = vmatprep.subr.mxu0 0.0
      %269 = vmatpush1.msra.mxu0 0.0
      %270 = vmatprep.subr.mxu0 0.0
      %271 = vmatpush1.msra.mxu0 0.0
      %272 = vmatprep.subr.mxu0 0.0
      %273 = vmatpush1.msra.mxu0 0.0
      %274 = vmatprep.subr.mxu0 0.0
      %275 = vmatpush1.msra.mxu0 0.0
      %276 = vmatprep.subr.mxu0 0.0
      %277 = vmatpush1.msra.mxu0 0.0
      %278 = vmatprep.subr.mxu0 0.0
      %279 = vmatpush1.msra.mxu0 0.0
      %280 = vmatprep.subr.mxu0 0.0
      %281 = vmatpush1.msra.mxu0 0.0
      %282 = vmatprep.mubr.f32.mxu0 0.0
      %283 = vmatmul.mubr.f32.gmra.mrb[0].mxu0 %v216
      %v284 = vpop.f32.mrb[0].mxu0
      %v285 = vadd.f32 %v212, %v284
      %v286 = vpop.f32.mrb[0].mxu0
      %287 = vdwg.mxu0
      %288 = vmax.xlane.f32.xlu0 %v285
      %v289 = vpop.xlane.xlu0 %288
      %v290 = vsub.f32 %v285, %v289
      %v291 = vmul.f32 %v290, 1.442695
      %v292 = vpow.pop %v291
      %293 = vadd.xlane.f32.xlu0 %v292
      %v294 = vpop.xlane.xlu0 %293
      %v295 = vlog2.pop %v294
      %v296 = vmul.f32 %v295, 0.6931472
      %v297 = vsub.f32 %v290, %v296
      %vm298 = vcmp.gt.f32.partialorder %v85, 0.5
      %s299 = sadd.s32 %s78, 2
      %v300 = vstv %s299
      %vm301 = vcmp.lt.s32.totalorder %v62, %v300
      %v302 = vsel %vm298, 1, 0
      %303 = vset.pattern.permute.xlu0 0
      %304 = vperm.xlu0 %303, %v302
      %v305 = vpop.permute.xlu0 %304
      %vm306 = vcmp.eq.s32.totalorder %v305, 1
      %v307 = vsel %vm306, 0.0, %v297
      %vm308 = vmand %vm98, %vm301
      %v309 = vsel %vm308, 1, 0
      %310 = vset.pattern.permute.xlu0 0
      %311 = vperm.xlu0 %310, %v309
      %v312 = vpop.permute.xlu0 %311
      %vm313 = vcmp.eq.s32.totalorder %v312, 1
      %v314 = vsel %vm313, 0.0, %v307
      %v315 = vadd.f32 %v84, 6.0
      %v316 = vrcp.pop 6.0
      %v317 = vmul.f32 %v315, %v316
      %v318 = vlog2.pop %v317
      %v319 = vmul.f32 %v318, 0.6931472
      %v320 = vmul.f32 %v319, 0.8
      %v321 = vmul.f32 %v320, 1.442695
      %v322 = vpow.pop %v321
      %v323 = vrcp.pop %v322
      %325 = vset.pattern.permute.xlu0 0
      %326 = vperm.xlu0 %325, %v83
      %v327 = vpop.permute.xlu0 %326
      %v329 = vadd.f32 %v327, %v314
      %331 = vset.pattern.permute.xlu0 0
      %332 = vperm.xlu0 %331, %v323
      %v333 = vpop.permute.xlu0 %332
      %v335 = vmul.f32 %v329, %v333
      %vm336 = vmor %vm98, %vm54
      %vm337 = vmand %vm36, %vm336
      %v338 = vsel %vm337, 1, 0
      %vm339 = vcmp.eq.s32.totalorder %v338, 1
      %v340 = vsel %vm339, %v335, -1e+30
      %341 = vmax.xlane.f32.xlu0 %v340
      %v342 = vpop.xlane.xlu0 %341
      %v343 = vsel %vm52, %v342, -1e+30
      %v344 = vrot.slane %v343, 4
      %v345 = vmax.f32 %v343, %v344
      %v346 = vrot.slane %v345, 2
      %v347 = vmax.f32 %v345, %v346
      %v348 = vrot.slane %v347, 1
      %v349 = vmax.f32 %v347, %v348
      %v350 = vsel %vm52, %v349, -1e+30
      %v351 = vsel %vm53, %v342, -1e+30
      %v352 = vrot.slane %v351, 4
      %v353 = vmax.f32 %v351, %v352
      %v354 = vrot.slane %v353, 2
      %v355 = vmax.f32 %v353, %v354
      %v356 = vrot.slane %v355, 1
      %v357 = vmax.f32 %v355, %v356
      %v358 = vsel %vm53, %v357, %v350
      %vm359 = vcmp.eq.f32.partialorder %v340, %v358
      %v360 = vsel %vm359, %v51, 1073741824
      %v361 = vand.u32 %v360, 65535
      %v362 = vshra.s32 %v360, 16
      %v363 = vcvt.s32.f32 %v361
      %v364 = vcvt.s32.f32 %v362
      %365 = vmin.xlane.f32.xlu0 %v364
      %v366 = vpop.xlane.xlu0 %365
      %vm367 = vcmp.eq.f32.partialorder %v364, %v366
      %v368 = vsel %vm367, %v363, inf
      %369 = vmin.xlane.f32.xlu0 %v368
      %v370 = vpop.xlane.xlu0 %369
      %v371 = vcvt.f32.s32 %v370
      %v372 = vcvt.f32.s32 %v366
      %v373 = vshll.u32 %v372, 16
      %v374 = vadd.s32 %v373, %v371
      %v375 = vsel %vm52, %v374, 1073741824
      %v376 = vrot.slane %v375, 4
      %vm377 = vcmp.lt.s32.totalorder %v375, %v376
      %v378 = vsel %vm377, %v375, %v376
      %v379 = vrot.slane %v378, 2
      %vm380 = vcmp.lt.s32.totalorder %v378, %v379
      %v381 = vsel %vm380, %v378, %v379
      %v382 = vrot.slane %v381, 1
      %vm383 = vcmp.lt.s32.totalorder %v381, %v382
      %v384 = vsel %vm383, %v381, %v382
      %v385 = vsel %vm52, %v384, 1073741824
      %v386 = vsel %vm53, %v374, 1073741824
      %v387 = vrot.slane %v386, 4
      %vm388 = vcmp.lt.s32.totalorder %v386, %v387
      %v389 = vsel %vm388, %v386, %v387
      %v390 = vrot.slane %v389, 2
      %vm391 = vcmp.lt.s32.totalorder %v389, %v390
      %v392 = vsel %vm391, %v389, %v390
      %v393 = vrot.slane %v392, 1
      %vm394 = vcmp.lt.s32.totalorder %v392, %v393
      %v395 = vsel %vm394, %v392, %v393
      %v396 = vsel %vm53, %v395, %v385
      %v397 = vsel %vm55, %v358, 0.0
      %v398 = vsel %vm55, %v396, 0
      %vm399 = vcmp.eq.s32.totalorder %v51, %v396
      %v400 = vsel %vm399, -1e+30, %v340
      %401 = vmax.xlane.f32.xlu0 %v400
      %v402 = vpop.xlane.xlu0 %401
      %v403 = vsel %vm52, %v402, -1e+30
      %v404 = vrot.slane %v403, 4
      %v405 = vmax.f32 %v403, %v404
      %v406 = vrot.slane %v405, 2
      %v407 = vmax.f32 %v405, %v406
      %v408 = vrot.slane %v407, 1
      %v409 = vmax.f32 %v407, %v408
      %v410 = vsel %vm52, %v409, -1e+30
      %v411 = vsel %vm53, %v402, -1e+30
      %v412 = vrot.slane %v411, 4
      %v413 = vmax.f32 %v411, %v412
      %v414 = vrot.slane %v413, 2
      %v415 = vmax.f32 %v413, %v414
      %v416 = vrot.slane %v415, 1
      %v417 = vmax.f32 %v415, %v416
      %v418 = vsel %vm53, %v417, %v410
      %vm419 = vcmp.eq.f32.partialorder %v400, %v418
      %v420 = vsel %vm419, %v51, 1073741824
      %v421 = vand.u32 %v420, 65535
      %v422 = vshra.s32 %v420, 16
      %v423 = vcvt.s32.f32 %v421
      %v424 = vcvt.s32.f32 %v422
      %425 = vmin.xlane.f32.xlu0 %v424
      %v426 = vpop.xlane.xlu0 %425
      %vm427 = vcmp.eq.f32.partialorder %v424, %v426
      %v428 = vsel %vm427, %v423, inf
      %429 = vmin.xlane.f32.xlu0 %v428
      %v430 = vpop.xlane.xlu0 %429
      %v431 = vcvt.f32.s32 %v430
      %v432 = vcvt.f32.s32 %v426
      %v433 = vshll.u32 %v432, 16
      %v434 = vadd.s32 %v433, %v431
      %v435 = vsel %vm52, %v434, 1073741824
      %v436 = vrot.slane %v435, 4
      %vm437 = vcmp.lt.s32.totalorder %v435, %v436
      %v438 = vsel %vm437, %v435, %v436
      %v439 = vrot.slane %v438, 2
      %vm440 = vcmp.lt.s32.totalorder %v438, %v439
      %v441 = vsel %vm440, %v438, %v439
      %v442 = vrot.slane %v441, 1
      %vm443 = vcmp.lt.s32.totalorder %v441, %v442
      %v444 = vsel %vm443, %v441, %v442
      %v445 = vsel %vm52, %v444, 1073741824
      %v446 = vsel %vm53, %v434, 1073741824
      %v447 = vrot.slane %v446, 4
      %vm448 = vcmp.lt.s32.totalorder %v446, %v447
      %v449 = vsel %vm448, %v446, %v447
      %v450 = vrot.slane %v449, 2
      %vm451 = vcmp.lt.s32.totalorder %v449, %v450
      %v452 = vsel %vm451, %v449, %v450
      %v453 = vrot.slane %v452, 1
      %vm454 = vcmp.lt.s32.totalorder %v452, %v453
      %v455 = vsel %vm454, %v452, %v453
      %v456 = vsel %vm53, %v455, %v445
      %v457 = vsel %vm57, %v418, %v397
      %v458 = vsel %vm57, %v456, %v398
      %vm459 = vcmp.eq.s32.totalorder %v51, %v456
      %v460 = vsel %vm459, -1e+30, %v400
      %461 = vmax.xlane.f32.xlu0 %v460
      %v462 = vpop.xlane.xlu0 %461
      %v463 = vsel %vm52, %v462, -1e+30
      %v464 = vrot.slane %v463, 4
      %v465 = vmax.f32 %v463, %v464
      %v466 = vrot.slane %v465, 2
      %v467 = vmax.f32 %v465, %v466
      %v468 = vrot.slane %v467, 1
      %v469 = vmax.f32 %v467, %v468
      %v470 = vsel %vm52, %v469, -1e+30
      %v471 = vsel %vm53, %v462, -1e+30
      %v472 = vrot.slane %v471, 4
      %v473 = vmax.f32 %v471, %v472
      %v474 = vrot.slane %v473, 2
      %v475 = vmax.f32 %v473, %v474
      %v476 = vrot.slane %v475, 1
      %v477 = vmax.f32 %v475, %v476
      %v478 = vsel %vm53, %v477, %v470
      %vm479 = vcmp.eq.f32.partialorder %v460, %v478
      %v480 = vsel %vm479, %v51, 1073741824
      %v481 = vand.u32 %v480, 65535
      %v482 = vshra.s32 %v480, 16
      %v483 = vcvt.s32.f32 %v481
      %v484 = vcvt.s32.f32 %v482
      %485 = vmin.xlane.f32.xlu0 %v484
      %v486 = vpop.xlane.xlu0 %485
      %vm487 = vcmp.eq.f32.partialorder %v484, %v486
      %v488 = vsel %vm487, %v483, inf
      %489 = vmin.xlane.f32.xlu0 %v488
      %v490 = vpop.xlane.xlu0 %489
      %v491 = vcvt.f32.s32 %v490
      %v492 = vcvt.f32.s32 %v486
      %v493 = vshll.u32 %v492, 16
      %v494 = vadd.s32 %v493, %v491
      %v495 = vsel %vm52, %v494, 1073741824
      %v496 = vrot.slane %v495, 4
      %vm497 = vcmp.lt.s32.totalorder %v495, %v496
      %v498 = vsel %vm497, %v495, %v496
      %v499 = vrot.slane %v498, 2
      %vm500 = vcmp.lt.s32.totalorder %v498, %v499
      %v501 = vsel %vm500, %v498, %v499
      %v502 = vrot.slane %v501, 1
      %vm503 = vcmp.lt.s32.totalorder %v501, %v502
      %v504 = vsel %vm503, %v501, %v502
      %v505 = vsel %vm52, %v504, 1073741824
      %v506 = vsel %vm53, %v494, 1073741824
      %v507 = vrot.slane %v506, 4
      %vm508 = vcmp.lt.s32.totalorder %v506, %v507
      %v509 = vsel %vm508, %v506, %v507
      %v510 = vrot.slane %v509, 2
      %vm511 = vcmp.lt.s32.totalorder %v509, %v510
      %v512 = vsel %vm511, %v509, %v510
      %v513 = vrot.slane %v512, 1
      %vm514 = vcmp.lt.s32.totalorder %v512, %v513
      %v515 = vsel %vm514, %v512, %v513
      %v516 = vsel %vm53, %v515, %v505
      %v517 = vsel %vm59, %v478, %v457
      %v518 = vsel %vm59, %v516, %v458
      %v519 = vsel %vm308, 0, %v518
      %vm520 = vmand %vm98, %vm298
      %v521 = vsel %vm520, 0, %v519
      %vm522 = vcmp.ge.s32.totalorder %v521, 128
      %v523 = vsel %vm522, 1, 0
      %vm524 = vcmp.ge.s32.totalorder %v521, 256
      %v525 = vsel %vm524, 1, 0
      %v526 = vadd.s32 %v523, %v525
      %v527 = vmul.u32 %v526, 128
      %v528 = vsub.s32 %v521, %v527
      %v529 = vadd.s32 %v48, %v526
      %531 = vset.pattern.permute.xlu0 0
      %532 = vperm.xlu0 %531, %v84
      %v533 = vpop.permute.xlu0 %532
      %v535 = vsel %vm35, %v533, 0.0
      %vm536 = vcmask 64512
      %v537 = vsel %vm536, %v535, 0.0
      %v538 = vrot.slane %v537, 4
      %v539 = vadd.f32 %v537, %v538
      %v540 = vrot.slane %v539, 2
      %v541 = vadd.f32 %v539, %v540
      %v542 = vrot.slane %v541, 1
      %v543 = vadd.f32 %v541, %v542
      %545 = vset.pattern.permute.xlu0 0
      %546 = vperm.xlu0 %545, %v85
      %v547 = vpop.permute.xlu0 %546
      %v549 = vsel %vm35, %v547, 0.0
      %v550 = vsel %vm536, %v549, 0.0
      %v551 = vrot.slane %v550, 4
      %v552 = vadd.f32 %v550, %v551
      %v553 = vrot.slane %v552, 2
      %v554 = vadd.f32 %v552, %v553
      %v555 = vrot.slane %v554, 1
      %v556 = vadd.f32 %v554, %v555
      %557 = vset.pattern.permute.xlu0 0
      %558 = vperm.xlu0 %557, %v529
      %v559 = vpop.permute.xlu0 %558
      %vm560 = vcmp.eq.s32.totalorder %v34, %v559
      %v561 = vsel %vm560, %v543, 0.0
      %v562 = vsel %vm536, %v561, 0.0
      %563 = vadd.xlane.f32.xlu0 %v562
      %v564 = vpop.xlane.xlu0 %563
      %v565 = vsel %vm560, %v556, 0.0
      %v566 = vsel %vm536, %v565, 0.0
      %567 = vadd.xlane.f32.xlu0 %v566
      %v568 = vpop.xlane.xlu0 %567
      %vm569 = vcmp.ne.s32.totalorder %v528, 0
      %v570 = vsel %vm569, 1, 0
      %v571 = vcvt.s32.f32 %v570
      %v572 = vadd.f32 %v564, %v571
      %vm573 = vcmp.eq.s32.totalorder %v528, 2
      %v574 = vsel %vm573, 1, 0
      %v575 = vcvt.s32.f32 %v574
      %v576 = vmax.f32 %v568, %v575
      %v577 = vsel %vm36, %v576, 0.0
      %v578 = vsel %vm99, 1, 0
      %vm579 = vcmp.eq.s32.totalorder %v578, 1
      %v580 = vsel %vm579, %v83, %v517
      %581 = vst.msk [vmem:[#allocation2] sm:$0xff] %vm64, %v580
      %v582 = vsel %vm579, %v84, %v572
      %583 = vst.msk [vmem:[#allocation3] sm:$0xff] %vm64, %v582
      %v584 = vsel %vm579, %v85, %v577
      %585 = vst.msk [vmem:[#allocation4] sm:$0xff] %vm64, %v584
      %v586 = vsel %vm579, %v86, %v528
      %587 = vst.msk [vmem:[#allocation5] sm:$0xff] %vm64, %v586
      %vm588 = vmxor %vm99, 1
      %v589 = vstv %s78
      %vm590 = vcmp.eq.s32.totalorder %v34, %v589
      %v591 = vsel %vm588, 1, 0
      %592 = vset.pattern.permute.xlu0 0
      %593 = vperm.xlu0 %592, %v591
      %v594 = vpop.permute.xlu0 %593
      %vm595 = vcmp.eq.s32.totalorder %v594, 1
      %vm596 = vmand %vm590, %vm595
      %v597 = vld [vmem:[#allocation6] sm:$0xff]
      %598 = vset.pattern.permute.xlu0 0
      %599 = vperm.xlu0 %598, %v526
      %v600 = vpop.permute.xlu0 %599
      %v601 = vsel %vm596, %v600, %v597
      %602 = vst [vmem:[#allocation6] sm:$0xff] %v601
      %v603 = vld [vmem:[#allocation8] sm:$0xff]
      %604 = vset.pattern.permute.xlu0 0
      %605 = vperm.xlu0 %604, %v528
      %v606 = vpop.permute.xlu0 %605
      %v607 = vsel %vm596, %v606, %v603
      %608 = vst [vmem:[#allocation8] sm:$0xff] %v607
      %v609 = vld [vmem:[#allocation10] sm:$0x1]
      %v610 = vsel %vm99, %v609, %v300
      %611 = vst.msk [vmem:[#allocation10] sm:$0x1] %vm75, %v610
    $region34: #{run.3} parent=1 // loop_footer
      %s82 = sadd.s32 1, %s78
    $region35: #{run.3} parent=1 // loop_footer_branch
      %77 = sbr.rel target = $region31
    $region36: #{run.3} parent=1 // loop_exit
      _
    // Predicated region
    $region37: #{run.3} parent=1 // pred_check
      _
    $region38: #{run.3} parent=1 // pred_check_branch
      %613 = sbr.rel (0) target = $region40
    $region39: #{run.3} parent=1 // pred_region
      %s615 = ssub.s32 128, 128
      %616 = vsyncadd [#allocation7], %s615
      %s618 = sshll.u32 [#allocation6], 4
      %s619 = int_to_ptr.vmem [resolvable:$true] %s618
      %621 = dma.vmem_to_hbm [thread:$0]  %s619, 128, %s7, [#allocation7]
    $region40: #{run.3} parent=1 // pred_fallthru
      _
    // Predicated region
    $region41: #{run.3} parent=1 // pred_check
      _
    $region42: #{run.3} parent=1 // pred_check_branch
      %623 = sbr.rel (0) target = $region44
    $region43: #{run.3} parent=1 // pred_region
      %s625 = ssub.s32 128, 128
      %626 = vsyncadd [#allocation9], %s625
      %s628 = sshll.u32 [#allocation8], 4
      %s629 = int_to_ptr.vmem [resolvable:$true] %s628
      %631 = dma.vmem_to_hbm [thread:$0]  %s629, 128, %s8, [#allocation9]
    $region44: #{run.3} parent=1 // pred_fallthru
      _
    // Predicated region
    $region45: #{run.3} parent=1 // pred_check
      _
    $region46: #{run.3} parent=1 // pred_check_branch
      %633 = sbr.rel (0) target = $region48
    $region47: #{run.3} parent=1 // pred_region
      %s635 = ssub.s32 16, 16
      %636 = vsyncadd [#allocation9], %s635
      %s638 = sshll.u32 [#allocation10], 4
      %s639 = int_to_ptr.vmem [resolvable:$true] %s638
      %641 = dma.vmem_to_hbm [thread:$0]  %s639, 16, %s9, [#allocation9]
    $region48: #{run.3} parent=1 // pred_fallthru
      _
    // Predicated region
    $region49: #{run.3} parent=1 // pred_check
      _
    $region50: #{run.3} parent=1 // pred_check_branch
      %643 = sbr.rel (0) target = $region52
    $region51: #{run.3} parent=1 // pred_region
      %644 = dma.done [#allocation7], 128
    $region52: #{run.3} parent=1 // pred_fallthru
      _
    // Predicated region
    $region53: #{run.3} parent=1 // pred_check
      _
    $region54: #{run.3} parent=1 // pred_check_branch
      %646 = sbr.rel (0) target = $region56
    $region55: #{run.3} parent=1 // pred_region
      %647 = dma.done [#allocation9], 128
    $region56: #{run.3} parent=1 // pred_fallthru
      _
    // Predicated region
    $region57: #{run.3} parent=1 // pred_check
      _
    $region58: #{run.3} parent=1 // pred_check_branch
      %649 = sbr.rel (0) target = $region60
    $region59: #{run.3} parent=1 // pred_region
      %650 = dma.done [#allocation9], 16
    $region60: #{run.3} parent=1 // pred_fallthru
      _
    %651 = vsyncpa [#allocation7], 1
    %652 = vsyncpa [#allocation9], 1

</llo_original>
